<compile_context>
chip_gen: v7x
topology: tpu7x:2x2x1
jax: 0.10.0
libtpu: 0.0.40
codegen_flags: <defaults>
</compile_context>

<pallas_src>
import math
from functools import partial

import jax
import jax.numpy as jnp
import numpy as np
from jax.experimental import pallas as pl
from jax.experimental.pallas import tpu as pltpu


def _caa_kernel(q_ref, k_ref, v_ref, ctx_ref,
                u_kv_ref, w_gate_ref, w_in_ref, w_out_ref, b_ref,
                out_ref, *, dim_model):
    bblk, lq, e = q_ref.shape
    lk = k_ref.shape[1]
    dc = ctx_ref.shape[2]
    cdt = u_kv_ref.dtype  # MXU compute dtype (bf16 on v6e/v7x, f32 for exact checking)

    # ---- flatten batch into the M / sublane dimension for all projection matmuls ----
    q2 = q_ref[...].reshape(bblk * lq, e)
    k2 = k_ref[...].reshape(bblk * lk, e)
    v2 = v_ref[...].reshape(bblk * lk, e)
    ctx2 = ctx_ref[...].reshape(bblk * lk, dc)

    # ---- fused context projection: [key_ctx | val_ctx] = ctx @ [u_k^T | u_v^T] ----
    kv_ctx = jnp.dot(ctx2, u_kv_ref[...], preferred_element_type=jnp.float32)
    key_ctx = kv_ctx[:, :e]
    val_ctx = kv_ctx[:, e:]

    # ---- gating scalars: VPU multiply + lane reduce (replaces four N=1 MXU matvecs) ----
    wg = w_gate_ref[...]            # (4, E) f32: rows = w1_k, w2_k, w1_v, w2_v
    kf = k2.astype(jnp.float32)
    vf = v2.astype(jnp.float32)
    lam_k = jax.nn.sigmoid(
        jnp.sum(kf * wg[0:1, :], axis=-1, keepdims=True)
        + jnp.sum(key_ctx * wg[1:2, :], axis=-1, keepdims=True))
    lam_v = jax.nn.sigmoid(
        jnp.sum(vf * wg[2:3, :], axis=-1, keepdims=True)
        + jnp.sum(val_ctx * wg[3:4, :], axis=-1, keepdims=True))

    k_cap = (1.0 - lam_k) * kf + lam_k * key_ctx
    v_cap = (1.0 - lam_v) * vf + lam_v * val_ctx

    # ---- nn.MultiheadAttention in-projections (1 head, bias=True), packed weights ----
    b = b_ref[...]                                   # (1, 4E) f32
    b_q = b[:, :e]
    b_k = b[:, e:2 * e]
    b_v = b[:, 2 * e:3 * e]
    b_o = b[:, 3 * e:]
    qp = jnp.dot(q2, w_in_ref[:, :e],
                 preferred_element_type=jnp.float32) + b_q
    kp = jnp.dot(k_cap.astype(cdt), w_in_ref[:, e:2 * e],
                 preferred_element_type=jnp.float32) + b_k
    vp = jnp.dot(v_cap.astype(cdt), w_in_ref[:, 2 * e:],
                 preferred_element_type=jnp.float32) + b_v

    # ---- scaled dot-product attention, batched over Bblk (no kp.T materialization) ----
    qp3 = qp.reshape(bblk, lq, e).astype(cdt)
    kp3 = kp.reshape(bblk, lk, e).astype(cdt)
    vp3 = vp.reshape(bblk, lk, e).astype(cdt)
    scale = 1.0 / math.sqrt(dim_model)
    scores = jnp.einsum('bqd,bkd->bqk', qp3, kp3,
                        preferred_element_type=jnp.float32) * scale
    m = jnp.max(scores, axis=-1, keepdims=True)
    p = jnp.exp(scores - m)
    attn = p * pl.reciprocal(jnp.sum(p, axis=-1, keepdims=True), approx=True)
    ctx_out = jnp.einsum('bqk,bkd->bqd', attn.astype(cdt), vp3,
                         preferred_element_type=jnp.float32)

    # ---- output projection ----
    out2 = jnp.dot(ctx_out.reshape(bblk * lq, e).astype(cdt), w_out_ref[...],
                   preferred_element_type=jnp.float32) + b_o
    out_ref[...] = out2.reshape(bblk, lq, e).astype(out_ref.dtype)


def _choose_batch_block(B, Lq, Lk, target_rows=512):
    """Largest divisor of B with Bblk*max(Lq,Lk) <= target_rows, while keeping >=2
    grid steps whenever B >= 2 (so v7x's two TensorCores are both used)."""
    cap = max(1, target_rows // max(Lq, Lk, 1))
    if B >= 2:
        cap = min(cap, B // 2)
    cap = max(1, min(cap, B))
    for d in range(cap, 0, -1):
        if B % d == 0:
            return d
    return 1


def context_aware_attention(q, k, v, context, params,
                            compute_dtype=jnp.bfloat16,
                            batch_block=None):
    """q: (B, Lq, E), k/v: (B, Lk, E), context: (B, Lk, Dc). Returns (B, Lq, E).

    `params` holds the pre-transposed nn.Linear / in_proj matrices ((in, out) layout).
    `compute_dtype` is the MXU operand dtype (bf16 recommended on v6e/v7x)."""
    B, Lq, E = q.shape
    _, Lk, _ = k.shape
    Dc = context.shape[-1]
    out_dtype = q.dtype

    bblk = batch_block if batch_block is not None else _choose_batch_block(B, Lq, Lk)
    assert B % bblk == 0, "batch_block must divide the batch size"
    grid = (B // bblk,)

    cdt = compute_dtype
    # MXU operands in compute_dtype (halves DMA bytes when bf16); gate vectors and biases
    # stay f32 (pure VPU / epilogue work, per the perf review).
    qc, kc, vc, ctxc = (x.astype(cdt) for x in (q, k, v, context))
    u_kv = jnp.concatenate([params["uk_T"], params["uv_T"]], axis=1).astype(cdt)     # (Dc, 2E)
    w_in = jnp.concatenate([params["wq_T"], params["wk_T"], params["wv_T"]],
                           axis=1).astype(cdt)                                       # (E, 3E)
    w_out = params["wo_T"].astype(cdt)                                               # (E, E)
    w_gate = jnp.concatenate([params["w1k_T"].T, params["w2k_T"].T,
                              params["w1v_T"].T, params["w2v_T"].T],
                             axis=0).astype(jnp.float32)                             # (4, E)
    b_all = jnp.concatenate([params["bq"], params["bk"], params["bv"],
                             params["bo"]], axis=1).astype(jnp.float32)              # (1, 4E)

    def seq_spec(L, D):
        return pl.BlockSpec((bblk, L, D), lambda i: (i, 0, 0))

    def full_spec(shape):
        return pl.BlockSpec(shape, lambda i, _n=len(shape): (0,) * _n)

    in_specs = [
        seq_spec(Lq, E),        # q
        seq_spec(Lk, E),        # k
        seq_spec(Lk, E),        # v
        seq_spec(Lk, Dc),       # context
        full_spec(u_kv.shape),  # [u_k^T | u_v^T]
        full_spec(w_gate.shape),# stacked gate row-vectors
        full_spec(w_in.shape),  # [Wq^T | Wk^T | Wv^T]
        full_spec(w_out.shape), # Wo^T
        full_spec(b_all.shape), # [bq | bk | bv | bo]
    ]

    kernel = partial(_caa_kernel, dim_model=E)

    return pl.pallas_call(
        kernel,
        out_shape=jax.ShapeDtypeStruct((B, Lq, E), out_dtype),
        grid_spec=pltpu.PrefetchScalarGridSpec(
            num_scalar_prefetch=0,
            grid=grid,
            in_specs=in_specs,
            out_specs=pl.BlockSpec((bblk, Lq, E), lambda i: (i, 0, 0)),
        ),
        compiler_params=pltpu.CompilerParams(
            dimension_semantics=("parallel",)),
    )(qc, kc, vc, ctxc, u_kv, w_gate, w_in, w_out, b_all)


def _reference(q, k, v, context, params):
    # Pure-JAX (f32) reference of the same math.
    key_ctx = context @ params["uk_T"]
    val_ctx = context @ params["uv_T"]
    lam_k = jax.nn.sigmoid(k @ params["w1k_T"] + key_ctx @ params["w2k_T"])
    lam_v = jax.nn.sigmoid(v @ params["w1v_T"] + val_ctx @ params["w2v_T"])
    k_cap = (1 - lam_k) * k + lam_k * key_ctx
    v_cap = (1 - lam_v) * v + lam_v * val_ctx
    qp = q @ params["wq_T"] + params["bq"]
    kp = k_cap @ params["wk_T"] + params["bk"]
    vp = v_cap @ params["wv_T"] + params["bv"]
    scores = jnp.einsum("bqd,bkd->bqk", qp, kp) / math.sqrt(q.shape[-1])
    attn = jax.nn.softmax(scores, axis=-1)
    out = jnp.einsum("bqk,bkd->bqd", attn, vp)
    return out @ params["wo_T"] + params["bo"]


if __name__ == "__main__":
    B, Lq, Lk = 2, 8, 8
    dim_model, dim_context = 32, 16

    key = jax.random.PRNGKey(0)
    keys = jax.random.split(key, 18)

    q = jax.random.normal(keys[0], (B, Lq, dim_model), jnp.float32)
    k = jax.random.normal(keys[1], (B, Lk, dim_model), jnp.float32)
    v = jax.random.normal(keys[2], (B, Lk, dim_model), jnp.float32)
    context = jax.random.normal(keys[3], (B, Lk, dim_context), jnp.float32)

    s = 0.1
    params = {
        # Linear weights stored pre-transposed: (in_features, out_features)
        "uk_T":  s * jax.random.normal(keys[4],  (dim_context, dim_model), jnp.float32),
        "uv_T":  s * jax.random.normal(keys[5],  (dim_context, dim_model), jnp.float32),
        "w1k_T": s * jax.random.normal(keys[6],  (dim_model, 1), jnp.float32),
        "w2k_T": s * jax.random.normal(keys[7],  (dim_model, 1), jnp.float32),
        "w1v_T": s * jax.random.normal(keys[8],  (dim_model, 1), jnp.float32),
        "w2v_T": s * jax.random.normal(keys[9],  (dim_model, 1), jnp.float32),
        # MultiheadAttention in-projection (split q/k/v) and out-projection
        "wq_T":  s * jax.random.normal(keys[10], (dim_model, dim_model), jnp.float32),
        "wk_T":  s * jax.random.normal(keys[11], (dim_model, dim_model), jnp.float32),
        "wv_T":  s * jax.random.normal(keys[12], (dim_model, dim_model), jnp.float32),
        "bq":    s * jax.random.normal(keys[13], (1, dim_model), jnp.float32),
        "bk":    s * jax.random.normal(keys[14], (1, dim_model), jnp.float32),
        "bv":    s * jax.random.normal(keys[15], (1, dim_model), jnp.float32),
        "wo_T":  s * jax.random.normal(keys[16], (dim_model, dim_model), jnp.float32),
        "bo":    s * jax.random.normal(keys[17], (1, dim_model), jnp.float32),
    }
    # dropout_rate defaults to 0.0 in the module => dropout is a no-op and is elided.

    ref = _reference(q, k, v, context, params)

    # 1) f32 MXU operands: tight algorithmic check (approx reciprocal => ~1e-3-level dev).
    out_f32 = jax.block_until_ready(
        context_aware_attention(q, k, v, context, params, compute_dtype=jnp.float32))
    np.testing.assert_allclose(np.asarray(out_f32), np.asarray(ref), rtol=5e-3, atol=5e-3)

    # 2) bf16 MXU operands (recommended on v6e/v7x): looser tolerance per the perf review.
    out_bf16 = jax.block_until_ready(
        context_aware_attention(q, k, v, context, params, compute_dtype=jnp.bfloat16))
    np.testing.assert_allclose(np.asarray(out_bf16), np.asarray(ref), rtol=4e-2, atol=4e-2)

    print("KERNEL_OK")
</pallas_src>

<mosaic_0001>
module attributes {stable_mosaic.version = 11 : i64} {
  func.func @_caa_kernel(%arg0: i32, %arg1: memref<1x8x32xf32, #tpu.memory_space<vmem>>, %arg2: memref<1x8x32xf32, #tpu.memory_space<vmem>>, %arg3: memref<1x8x32xf32, #tpu.memory_space<vmem>>, %arg4: memref<1x8x16xf32, #tpu.memory_space<vmem>>, %arg5: memref<16x64xf32, #tpu.memory_space<vmem>>, %arg6: memref<4x32xf32, #tpu.memory_space<vmem>>, %arg7: memref<32x96xf32, #tpu.memory_space<vmem>>, %arg8: memref<32x32xf32, #tpu.memory_space<vmem>>, %arg9: memref<1x128xf32, #tpu.memory_space<vmem>>, %arg10: memref<1x8x32xf32, #tpu.memory_space<vmem>>) attributes {dimension_semantics = [#tpu.dimension_semantics<parallel>], iteration_bounds = array<i64: 2>, scalar_prefetch = 0 : i64, scratch_operands = 0 : i64, tpu.core_type = #tpu.core_type<tc>, window_params = [{transform_indices = @transform_0, window_bounds = array<i64: 1, 8, 32>}, {transform_indices = @transform_1, window_bounds = array<i64: 1, 8, 32>}, {transform_indices = @transform_2, window_bounds = array<i64: 1, 8, 32>}, {transform_indices = @transform_3, window_bounds = array<i64: 1, 8, 16>}, {pipeline_mode = #tpu.pipeline_mode<synchronous>, transform_indices = @transform_4, window_bounds = array<i64: 16, 64>}, {pipeline_mode = #tpu.pipeline_mode<synchronous>, transform_indices = @transform_5, window_bounds = array<i64: 4, 32>}, {pipeline_mode = #tpu.pipeline_mode<synchronous>, transform_indices = @transform_6, window_bounds = array<i64: 32, 96>}, {pipeline_mode = #tpu.pipeline_mode<synchronous>, transform_indices = @transform_7, window_bounds = array<i64: 32, 32>}, {pipeline_mode = #tpu.pipeline_mode<synchronous>, transform_indices = @transform_8, window_bounds = array<i64: 1, 128>}, {transform_indices = @transform_9, window_bounds = array<i64: 1, 8, 32>}]} {
    %c0 = arith.constant 0 : index
    %c0_0 = arith.constant 0 : index
    %c0_1 = arith.constant 0 : index
    %0 = vector.load %arg1[%c0, %c0_0, %c0_1] : memref<1x8x32xf32, #tpu.memory_space<vmem>>, vector<1x8x32xf32>
    %1 = vector.shape_cast %0 : vector<1x8x32xf32> to vector<8x32xf32>
    %c0_2 = arith.constant 0 : index
    %c0_3 = arith.constant 0 : index
    %c0_4 = arith.constant 0 : index
    %2 = vector.load %arg2[%c0_2, %c0_3, %c0_4] : memref<1x8x32xf32, #tpu.memory_space<vmem>>, vector<1x8x32xf32>
    %3 = vector.shape_cast %2 : vector<1x8x32xf32> to vector<8x32xf32>
    %c0_5 = arith.constant 0 : index
    %c0_6 = arith.constant 0 : index
    %c0_7 = arith.constant 0 : index
    %4 = vector.load %arg3[%c0_5, %c0_6, %c0_7] : memref<1x8x32xf32, #tpu.memory_space<vmem>>, vector<1x8x32xf32>
    %5 = vector.shape_cast %4 : vector<1x8x32xf32> to vector<8x32xf32>
    %c0_8 = arith.constant 0 : index
    %c0_9 = arith.constant 0 : index
    %c0_10 = arith.constant 0 : index
    %6 = vector.load %arg4[%c0_8, %c0_9, %c0_10] : memref<1x8x16xf32, #tpu.memory_space<vmem>>, vector<1x8x16xf32>
    %7 = vector.shape_cast %6 : vector<1x8x16xf32> to vector<8x16xf32>
    %c0_11 = arith.constant 0 : index
    %c0_12 = arith.constant 0 : index
    %8 = vector.load %arg5[%c0_11, %c0_12] : memref<16x64xf32, #tpu.memory_space<vmem>>, vector<16x64xf32>
    %cst = arith.constant dense<0.000000e+00> : vector<8x64xf32>
    %9 = tpu.matmul %7, %8, %cst {dimension_numbers = #tpu.dot_dimension_numbers<[1], [0], [0], [1], [0, 0, 1, 1], [], []>} : vector<8x16xf32>, vector<16x64xf32>, vector<8x64xf32> -> vector<8x64xf32>
    %10 = vector.extract_strided_slice %9 {offsets = [0, 0], sizes = [8, 32], strides = [1, 1]} : vector<8x64xf32> to vector<8x32xf32>
    %11 = vector.extract_strided_slice %9 {offsets = [0, 32], sizes = [8, 32], strides = [1, 1]} : vector<8x64xf32> to vector<8x32xf32>
    %c0_13 = arith.constant 0 : index
    %c0_14 = arith.constant 0 : index
    %12 = vector.load %arg6[%c0_13, %c0_14] : memref<4x32xf32, #tpu.memory_space<vmem>>, vector<4x32xf32>
    %13 = vector.extract_strided_slice %12 {offsets = [0, 0], sizes = [1, 32], strides = [1, 1]} : vector<4x32xf32> to vector<1x32xf32>
    %14 = vector.broadcast %13 : vector<1x32xf32> to vector<8x32xf32>
    %15 = arith.mulf %3, %14 : vector<8x32xf32>
    %cst_15 = arith.constant dense<0.000000e+00> : vector<8xf32>
    %16 = vector.multi_reduction <add>, %15, %cst_15 [1] : vector<8x32xf32> to vector<8xf32>
    %17 = vector.shape_cast %16 : vector<8xf32> to vector<8x1xf32>
    %18 = vector.extract_strided_slice %12 {offsets = [1, 0], sizes = [1, 32], strides = [1, 1]} : vector<4x32xf32> to vector<1x32xf32>
    %19 = vector.broadcast %18 : vector<1x32xf32> to vector<8x32xf32>
    %20 = arith.mulf %10, %19 : vector<8x32xf32>
    %cst_16 = arith.constant dense<0.000000e+00> : vector<8xf32>
    %21 = vector.multi_reduction <add>, %20, %cst_16 [1] : vector<8x32xf32> to vector<8xf32>
    %22 = vector.shape_cast %21 : vector<8xf32> to vector<8x1xf32>
    %23 = arith.addf %17, %22 : vector<8x1xf32>
    %24 = arith.negf %23 : vector<8x1xf32>
    %25 = math.exp %24 : vector<8x1xf32>
    %cst_17 = arith.constant 1.000000e+00 : f32
    %26 = vector.broadcast %cst_17 : f32 to vector<8x1xf32>
    %27 = arith.addf %26, %25 : vector<8x1xf32>
    %28 = arith.divf %26, %27 : vector<8x1xf32>
    %29 = vector.extract_strided_slice %12 {offsets = [2, 0], sizes = [1, 32], strides = [1, 1]} : vector<4x32xf32> to vector<1x32xf32>
    %30 = vector.broadcast %29 : vector<1x32xf32> to vector<8x32xf32>
    %31 = arith.mulf %5, %30 : vector<8x32xf32>
    %cst_18 = arith.constant dense<0.000000e+00> : vector<8xf32>
    %32 = vector.multi_reduction <add>, %31, %cst_18 [1] : vector<8x32xf32> to vector<8xf32>
    %33 = vector.shape_cast %32 : vector<8xf32> to vector<8x1xf32>
    %34 = vector.extract_strided_slice %12 {offsets = [3, 0], sizes = [1, 32], strides = [1, 1]} : vector<4x32xf32> to vector<1x32xf32>
    %35 = vector.broadcast %34 : vector<1x32xf32> to vector<8x32xf32>
    %36 = arith.mulf %11, %35 : vector<8x32xf32>
    %cst_19 = arith.constant dense<0.000000e+00> : vector<8xf32>
    %37 = vector.multi_reduction <add>, %36, %cst_19 [1] : vector<8x32xf32> to vector<8xf32>
    %38 = vector.shape_cast %37 : vector<8xf32> to vector<8x1xf32>
    %39 = arith.addf %33, %38 : vector<8x1xf32>
    %40 = arith.negf %39 : vector<8x1xf32>
    %41 = math.exp %40 : vector<8x1xf32>
    %cst_20 = arith.constant 1.000000e+00 : f32
    %42 = vector.broadcast %cst_20 : f32 to vector<8x1xf32>
    %43 = arith.addf %42, %41 : vector<8x1xf32>
    %44 = arith.divf %42, %43 : vector<8x1xf32>
    %cst_21 = arith.constant 1.000000e+00 : f32
    %45 = vector.broadcast %cst_21 : f32 to vector<8x1xf32>
    %46 = arith.subf %45, %28 : vector<8x1xf32>
    %47 = vector.broadcast %46 : vector<8x1xf32> to vector<8x32xf32>
    %48 = arith.mulf %47, %3 : vector<8x32xf32>
    %49 = vector.broadcast %28 : vector<8x1xf32> to vector<8x32xf32>
    %50 = arith.mulf %49, %10 : vector<8x32xf32>
    %51 = arith.addf %48, %50 : vector<8x32xf32>
    %cst_22 = arith.constant 1.000000e+00 : f32
    %52 = vector.broadcast %cst_22 : f32 to vector<8x1xf32>
    %53 = arith.subf %52, %44 : vector<8x1xf32>
    %54 = vector.broadcast %53 : vector<8x1xf32> to vector<8x32xf32>
    %55 = arith.mulf %54, %5 : vector<8x32xf32>
    %56 = vector.broadcast %44 : vector<8x1xf32> to vector<8x32xf32>
    %57 = arith.mulf %56, %11 : vector<8x32xf32>
    %58 = arith.addf %55, %57 : vector<8x32xf32>
    %c0_23 = arith.constant 0 : index
    %c0_24 = arith.constant 0 : index
    %59 = vector.load %arg9[%c0_23, %c0_24] : memref<1x128xf32, #tpu.memory_space<vmem>>, vector<1x128xf32>
    %60 = vector.extract_strided_slice %59 {offsets = [0, 0], sizes = [1, 32], strides = [1, 1]} : vector<1x128xf32> to vector<1x32xf32>
    %61 = vector.extract_strided_slice %59 {offsets = [0, 32], sizes = [1, 32], strides = [1, 1]} : vector<1x128xf32> to vector<1x32xf32>
    %62 = vector.extract_strided_slice %59 {offsets = [0, 64], sizes = [1, 32], strides = [1, 1]} : vector<1x128xf32> to vector<1x32xf32>
    %63 = vector.extract_strided_slice %59 {offsets = [0, 96], sizes = [1, 32], strides = [1, 1]} : vector<1x128xf32> to vector<1x32xf32>
    %c0_25 = arith.constant 0 : index
    %c0_26 = arith.constant 0 : index
    %64 = vector.load %arg7[%c0_25, %c0_26] : memref<32x96xf32, #tpu.memory_space<vmem>>, vector<32x32xf32>
    %cst_27 = arith.constant dense<0.000000e+00> : vector<8x32xf32>
    %65 = tpu.matmul %1, %64, %cst_27 {dimension_numbers = #tpu.dot_dimension_numbers<[1], [0], [0], [1], [0, 0, 1, 1], [], []>} : vector<8x32xf32>, vector<32x32xf32>, vector<8x32xf32> -> vector<8x32xf32>
    %66 = vector.broadcast %60 : vector<1x32xf32> to vector<8x32xf32>
    %67 = arith.addf %65, %66 : vector<8x32xf32>
    %c0_28 = arith.constant 0 : index
    %c32 = arith.constant 32 : index
    %68 = vector.load %arg7[%c0_28, %c32] : memref<32x96xf32, #tpu.memory_space<vmem>>, vector<32x32xf32>
    %cst_29 = arith.constant dense<0.000000e+00> : vector<8x32xf32>
    %69 = tpu.matmul %51, %68, %cst_29 {dimension_numbers = #tpu.dot_dimension_numbers<[1], [0], [0], [1], [0, 0, 1, 1], [], []>} : vector<8x32xf32>, vector<32x32xf32>, vector<8x32xf32> -> vector<8x32xf32>
    %70 = vector.broadcast %61 : vector<1x32xf32> to vector<8x32xf32>
    %71 = arith.addf %69, %70 : vector<8x32xf32>
    %c0_30 = arith.constant 0 : index
    %c64 = arith.constant 64 : index
    %72 = vector.load %arg7[%c0_30, %c64] : memref<32x96xf32, #tpu.memory_space<vmem>>, vector<32x32xf32>
    %cst_31 = arith.constant dense<0.000000e+00> : vector<8x32xf32>
    %73 = tpu.matmul %58, %72, %cst_31 {dimension_numbers = #tpu.dot_dimension_numbers<[1], [0], [0], [1], [0, 0, 1, 1], [], []>} : vector<8x32xf32>, vector<32x32xf32>, vector<8x32xf32> -> vector<8x32xf32>
    %74 = vector.broadcast %62 : vector<1x32xf32> to vector<8x32xf32>
    %75 = arith.addf %73, %74 : vector<8x32xf32>
    %76 = vector.shape_cast %67 : vector<8x32xf32> to vector<1x8x32xf32>
    %77 = vector.shape_cast %71 : vector<8x32xf32> to vector<1x8x32xf32>
    %78 = vector.shape_cast %75 : vector<8x32xf32> to vector<1x8x32xf32>
    "tpu.trace_start"() <{level = 10 : i32, message = "bqd,bkd->bqk"}> : () -> ()
    %cst_32 = arith.constant dense<0.000000e+00> : vector<1x8x8xf32>
    %79 = tpu.matmul %76, %77, %cst_32 {dimension_numbers = #tpu.dot_dimension_numbers<[2], [2], [1], [1], [0, 0, 0, 1, 1, 1], [0], [0]>} : vector<1x8x32xf32>, vector<1x8x32xf32>, vector<1x8x8xf32> -> vector<1x8x8xf32>
    "tpu.trace_stop"() : () -> ()
    %cst_33 = arith.constant 0.176776692 : f32
    %80 = vector.broadcast %cst_33 : f32 to vector<1x8x8xf32>
    %81 = arith.mulf %79, %80 : vector<1x8x8xf32>
    %cst_34 = arith.constant dense<0xFF800000> : vector<1x8xf32>
    %82 = vector.multi_reduction <maximumf>, %81, %cst_34 [2] : vector<1x8x8xf32> to vector<1x8xf32>
    %83 = vector.shape_cast %82 : vector<1x8xf32> to vector<1x8x1xf32>
    %84 = vector.broadcast %83 : vector<1x8x1xf32> to vector<1x8x8xf32>
    %85 = arith.subf %81, %84 : vector<1x8x8xf32>
    %86 = math.exp %85 : vector<1x8x8xf32>
    %cst_35 = arith.constant dense<0.000000e+00> : vector<1x8xf32>
    %87 = vector.multi_reduction <add>, %86, %cst_35 [2] : vector<1x8x8xf32> to vector<1x8xf32>
    %88 = vector.shape_cast %87 : vector<1x8xf32> to vector<1x8x1xf32>
    %89 = tpu.reciprocal %88 {approx = true} : vector<1x8x1xf32> -> vector<1x8x1xf32>
    %90 = vector.broadcast %89 : vector<1x8x1xf32> to vector<1x8x8xf32>
    %91 = arith.mulf %86, %90 : vector<1x8x8xf32>
    "tpu.trace_start"() <{level = 10 : i32, message = "bqk,bkd->bqd"}> : () -> ()
    %cst_36 = arith.constant dense<0.000000e+00> : vector<1x8x32xf32>
    %92 = tpu.matmul %91, %78, %cst_36 {dimension_numbers = #tpu.dot_dimension_numbers<[2], [1], [1], [2], [0, 0, 0, 1, 1, 2], [0], [0]>} : vector<1x8x8xf32>, vector<1x8x32xf32>, vector<1x8x32xf32> -> vector<1x8x32xf32>
    "tpu.trace_stop"() : () -> ()
    %93 = vector.shape_cast %92 : vector<1x8x32xf32> to vector<8x32xf32>
    %c0_37 = arith.constant 0 : index
    %c0_38 = arith.constant 0 : index
    %94 = vector.load %arg8[%c0_37, %c0_38] : memref<32x32xf32, #tpu.memory_space<vmem>>, vector<32x32xf32>
    %cst_39 = arith.constant dense<0.000000e+00> : vector<8x32xf32>
    %95 = tpu.matmul %93, %94, %cst_39 {dimension_numbers = #tpu.dot_dimension_numbers<[1], [0], [0], [1], [0, 0, 1, 1], [], []>} : vector<8x32xf32>, vector<32x32xf32>, vector<8x32xf32> -> vector<8x32xf32>
    %96 = vector.broadcast %63 : vector<1x32xf32> to vector<8x32xf32>
    %97 = arith.addf %95, %96 : vector<8x32xf32>
    %98 = vector.shape_cast %97 : vector<8x32xf32> to vector<1x8x32xf32>
    %c0_40 = arith.constant 0 : index
    %c0_41 = arith.constant 0 : index
    %c0_42 = arith.constant 0 : index
    %99 = vector.load %arg10[%c0_40, %c0_41, %c0_42] : memref<1x8x32xf32, #tpu.memory_space<vmem>>, vector<1x8x32xf32>
    tpu.vector_store %arg10[%c0_40, %c0_41, %c0_42], %98 {strides = array<i32>} : memref<1x8x32xf32, #tpu.memory_space<vmem>>, vector<1x8x32xf32>,
    return
  }
  func.func @transform_0(%arg0: i32) -> (i32, i32, i32) {
    %c0_i32 = arith.constant 0 : i32
    %c0_i32_0 = arith.constant 0 : i32
    %c0_i32_1 = arith.constant 0 : i32
    return %arg0, %c0_i32, %c0_i32_0 : i32, i32, i32
  }
  func.func @transform_1(%arg0: i32) -> (i32, i32, i32) {
    %c0_i32 = arith.constant 0 : i32
    %c0_i32_0 = arith.constant 0 : i32
    %c0_i32_1 = arith.constant 0 : i32
    return %arg0, %c0_i32, %c0_i32_0 : i32, i32, i32
  }
  func.func @transform_2(%arg0: i32) -> (i32, i32, i32) {
    %c0_i32 = arith.constant 0 : i32
    %c0_i32_0 = arith.constant 0 : i32
    %c0_i32_1 = arith.constant 0 : i32
    return %arg0, %c0_i32, %c0_i32_0 : i32, i32, i32
  }
  func.func @transform_3(%arg0: i32) -> (i32, i32, i32) {
    %c0_i32 = arith.constant 0 : i32
    %c0_i32_0 = arith.constant 0 : i32
    %c0_i32_1 = arith.constant 0 : i32
    return %arg0, %c0_i32, %c0_i32_0 : i32, i32, i32
  }
  func.func @transform_4(%arg0: i32) -> (i32, i32) {
    %c0_i32 = arith.constant 0 : i32
    %c0_i32_0 = arith.constant 0 : i32
    %c0_i32_1 = arith.constant 0 : i32
    return %c0_i32, %c0_i32_0 : i32, i32
  }
  func.func @transform_5(%arg0: i32) -> (i32, i32) {
    %c0_i32 = arith.constant 0 : i32
    %c0_i32_0 = arith.constant 0 : i32
    %c0_i32_1 = arith.constant 0 : i32
    return %c0_i32, %c0_i32_0 : i32, i32
  }
  func.func @transform_6(%arg0: i32) -> (i32, i32) {
    %c0_i32 = arith.constant 0 : i32
    %c0_i32_0 = arith.constant 0 : i32
    %c0_i32_1 = arith.constant 0 : i32
    return %c0_i32, %c0_i32_0 : i32, i32
  }
  func.func @transform_7(%arg0: i32) -> (i32, i32) {
    %c0_i32 = arith.constant 0 : i32
    %c0_i32_0 = arith.constant 0 : i32
    %c0_i32_1 = arith.constant 0 : i32
    return %c0_i32, %c0_i32_0 : i32, i32
  }
  func.func @transform_8(%arg0: i32) -> (i32, i32) {
    %c0_i32 = arith.constant 0 : i32
    %c0_i32_0 = arith.constant 0 : i32
    %c0_i32_1 = arith.constant 0 : i32
    return %c0_i32, %c0_i32_0 : i32, i32
  }
  func.func @transform_9(%arg0: i32) -> (i32, i32, i32) {
    %c0_i32 = arith.constant 0 : i32
    %c0_i32_0 = arith.constant 0 : i32
    %c0_i32_1 = arith.constant 0 : i32
    return %arg0, %c0_i32, %c0_i32_0 : i32, i32, i32
  }
}

</mosaic_0001>

<llo_original>
// kernel: tpu_custom_call.1
$region0: #{tpu_custom_call.1}
  #allocation0 [shape = 'u32[]', space=smem, size = 0x4, offset = 0x4, fixed_abs, tag = 'smem constant byte address 0x4 - core index']
  #allocation1 [shape = 'u32[144,128]{1,0:T(1,128)}', space=vmem, size = 0x12000, scoped, tag = 'internal scratch']
  %s0 = inlined_call_operand.hbm [shape: f32[2,8,32], index: 0, kind: input, shape index: {}]
  %s1 = inlined_call_operand.hbm [shape: f32[2,8,32], index: 1, kind: input, shape index: {}]
  %s2 = inlined_call_operand.hbm [shape: f32[2,8,32], index: 2, kind: input, shape index: {}]
  %s3 = inlined_call_operand.hbm [shape: f32[2,8,16], index: 3, kind: input, shape index: {}]
  %s4 = inlined_call_operand.hbm [shape: f32[16,64], index: 4, kind: input, shape index: {}]
  %s5 = inlined_call_operand.vmem [shape: f32[4,32], index: 5, kind: input, shape index: {}]
  %s6 = inlined_call_operand.hbm [shape: f32[32,96], index: 6, kind: input, shape index: {}]
  %s7 = inlined_call_operand.hbm [shape: f32[32,32], index: 7, kind: input, shape index: {}]
  %s8 = inlined_call_operand.vmem [shape: f32[1,128], index: 8, kind: input, shape index: {}]
  %s9 = inlined_call_operand.hbm [shape: f32[2,8,32], index: 9, kind: output, shape index: {}]
  %s10 = sld [smem:[#allocation0]]
  $region97: #{tpu_custom_call.1} parent=0
    _
  %s12 = ssub.s32 1, %s10
  %s13 = scalar_select 0, %s12, %s10
  $region1: #{tpu_custom_call.1} parent=0
    #allocation2 [shape = 'u8[8192]{0}', space=vmem, size = 0x2000, scoped, tag = 'input window, operand 0']
    #allocation3 [shape = 's32[2]{0}', space=sflag, size = 0x8, scoped, tag = 'scoped memory for tpu_custom_call.1']
    #allocation4 [shape = 's32[2]{0}', space=sflag, size = 0x8, scoped, tag = 'scoped memory for tpu_custom_call.1']
    #allocation5 [shape = 'u8[8192]{0}', space=vmem, size = 0x2000, scoped, tag = 'input window, operand 1']
    #allocation6 [shape = 's32[2]{0}', space=sflag, size = 0x8, scoped, tag = 'scoped memory for tpu_custom_call.1']
    #allocation7 [shape = 'u8[8192]{0}', space=vmem, size = 0x2000, scoped, tag = 'input window, operand 2']
    #allocation8 [shape = 'u8[8192]{0}', space=vmem, size = 0x2000, scoped, tag = 'input window, operand 3']
    #allocation9 [shape = 's32[2]{0}', space=sflag, size = 0x8, scoped, tag = 'scoped memory for tpu_custom_call.1']
    #allocation10 [shape = 'u8[8192]{0}', space=vmem, size = 0x2000, scoped, tag = 'input window, operand 4, single buffered']
    #allocation11 [shape = 'u8[16384]{0}', space=vmem, size = 0x4000, scoped, tag = 'input window, operand 6, single buffered']
    #allocation12 [shape = 's32[1]{0}', space=sflag, size = 0x4, scoped, tag = 'scoped memory for tpu_custom_call.1']
    #allocation13 [shape = 'u8[16384]{0}', space=vmem, size = 0x4000, scoped, tag = 'input window, operand 7, single buffered']
    #allocation14 [shape = 'u8[8192]{0}', space=vmem, size = 0x2000, scoped, tag = 'output window, operand 0']
    %14 = vsyncpa [#allocation3], 0
    %s15 = scalar_lea.sflag [#allocation3], 1
    %16 = vsyncpa %s15, 0
    %17 = vsyncpa [#allocation6], 0
    %s18 = scalar_lea.sflag [#allocation6], 1
    %19 = vsyncpa %s18, 0
    %20 = vsyncpa [#allocation9], 0
    %s21 = scalar_lea.sflag [#allocation9], 1
    %22 = vsyncpa %s21, 0
    %23 = vsyncpa [#allocation12], 0
    %24 = vsyncpa [#allocation4], 0
    %s25 = scalar_lea.sflag [#allocation4], 1
    %26 = vsyncpa %s25, 0
    loop: start=0, step=1, limit=4
    $region2: #{tpu_custom_call.1} parent=1 // loop_pre_header
      _
    $region3: #{tpu_custom_call.1} parent=1 // loop_header
      %s28 = sphi 0, %s32
      %p29 = scmp.ge.s32.totalorder %s28, 4
      %s38 = sphi 0, %s40
      %s41 = sphi 0, %s38
      %s42 = sphi 0, %s41
      %s58 = sphi 0, %s42
      %s64 = sphi 0, %s66
      %s67 = sphi 0, %s64
      %s68 = sphi 0, %s67
      %s84 = sphi 0, %s68
      %s90 = sphi 0, %s92
      %s93 = sphi 0, %s90
      %s94 = sphi 0, %s93
      %s110 = sphi 0, %s94
      %s116 = sphi 0, %s118
      %s119 = sphi 0, %s116
      %s120 = sphi 0, %s119
      %s136 = sphi 0, %s120
      %s140 = sphi 0, %s140
      %s142 = sphi 0, %s140
      %s143 = sphi 0, %s142
      %s157 = sphi 0, %s143
      %s161 = sphi 0, %s161
      %s163 = sphi 0, %s161
      %s164 = sphi 0, %s163
      %s178 = sphi 0, %s164
      %s182 = sphi 0, %s182
      %s184 = sphi 0, %s182
      %s185 = sphi 0, %s184
      %s199 = sphi 0, %s185
      %s203 = sphi 0, %s203
      %s205 = sphi 0, %s203
      %s206 = sphi 0, %s205
      %s220 = sphi 0, %s206
      %s224 = sphi 0, %s224
      %s226 = sphi 0, %s224
      %s227 = sphi 0, %s226
      %s241 = sphi 0, %s227
      %s247 = sphi 0, %s249
      %s250 = sphi 0, %s247
      %s251 = sphi 0, %s250
      %s267 = sphi 0, %s251
    $region4: #{tpu_custom_call.1} parent=1 // loop_header_branch
      %31 = sbr.rel (%p29) target = $region8
    $region5: #{tpu_custom_call.1} parent=1 // loop_body
      %s33 = ssub.s32 %s28, 1
      %s34 = ssub.s32 %s28, 2
      %s35 = sadd.s32 %s28, 1
      %s36 = ssub.s32 %s28, %s35
      %p37 = scmp.eq.s32.totalorder %s36, 0
      %s39 = sadd.s32 %s38, 1
      %s40 = scalar_select %p37, %s38, %s39
      %p43 = pneg %p37
      %p44 = scmp.eq.s32.totalorder %s28, 1
      %p45 = por %p43, %p44
      %p46 = scmp.ne.s32.totalorder %s38, %s41
      %p47 = scmp.eq.s32.totalorder %s28, 0
      %p48 = por %p46, %p47
      %p49 = scmp.ne.s32.totalorder %s38, %s41
      %p50 = scmp.eq.s32.totalorder %s33, 1
      %p51 = por %p49, %p50
      %p52 = scmp.ne.s32.totalorder %s41, %s42
      %p53 = scmp.eq.s32.totalorder %s33, 0
      %p54 = por %p52, %p53
      %p55 = scmp.ne.s32.totalorder %s41, %s42
      %p56 = scmp.eq.s32.totalorder %s34, 1
      %p57 = por %p55, %p56
      %p59 = scmp.ne.s32.totalorder %s42, %s58
      %p60 = scmp.eq.s32.totalorder %s34, 0
      %p61 = por %p59, %p60
      %s62 = ssub.s32 %s28, %s35
      %p63 = scmp.eq.s32.totalorder %s62, 0
      %s65 = sadd.s32 %s64, 1
      %s66 = scalar_select %p63, %s64, %s65
      %p69 = pneg %p63
      %p70 = scmp.eq.s32.totalorder %s28, 1
      %p71 = por %p69, %p70
      %p72 = scmp.ne.s32.totalorder %s64, %s67
      %p73 = scmp.eq.s32.totalorder %s28, 0
      %p74 = por %p72, %p73
      %p75 = scmp.ne.s32.totalorder %s64, %s67
      %p76 = scmp.eq.s32.totalorder %s33, 1
      %p77 = por %p75, %p76
      %p78 = scmp.ne.s32.totalorder %s67, %s68
      %p79 = scmp.eq.s32.totalorder %s33, 0
      %p80 = por %p78, %p79
      %p81 = scmp.ne.s32.totalorder %s67, %s68
      %p82 = scmp.eq.s32.totalorder %s34, 1
      %p83 = por %p81, %p82
      %p85 = scmp.ne.s32.totalorder %s68, %s84
      %p86 = scmp.eq.s32.totalorder %s34, 0
      %p87 = por %p85, %p86
      %s88 = ssub.s32 %s28, %s35
      %p89 = scmp.eq.s32.totalorder %s88, 0
      %s91 = sadd.s32 %s90, 1
      %s92 = scalar_select %p89, %s90, %s91
      %p95 = pneg %p89
      %p96 = scmp.eq.s32.totalorder %s28, 1
      %p97 = por %p95, %p96
      %p98 = scmp.ne.s32.totalorder %s90, %s93
      %p99 = scmp.eq.s32.totalorder %s28, 0
      %p100 = por %p98, %p99
      %p101 = scmp.ne.s32.totalorder %s90, %s93
      %p102 = scmp.eq.s32.totalorder %s33, 1
      %p103 = por %p101, %p102
      %p104 = scmp.ne.s32.totalorder %s93, %s94
      %p105 = scmp.eq.s32.totalorder %s33, 0
      %p106 = por %p104, %p105
      %p107 = scmp.ne.s32.totalorder %s93, %s94
      %p108 = scmp.eq.s32.totalorder %s34, 1
      %p109 = por %p107, %p108
      %p111 = scmp.ne.s32.totalorder %s94, %s110
      %p112 = scmp.eq.s32.totalorder %s34, 0
      %p113 = por %p111, %p112
      %s114 = ssub.s32 %s28, %s35
      %p115 = scmp.eq.s32.totalorder %s114, 0
      %s117 = sadd.s32 %s116, 1
      %s118 = scalar_select %p115, %s116, %s117
      %p121 = pneg %p115
      %p122 = scmp.eq.s32.totalorder %s28, 1
      %p123 = por %p121, %p122
      %p124 = scmp.ne.s32.totalorder %s116, %s119
      %p125 = scmp.eq.s32.totalorder %s28, 0
      %p126 = por %p124, %p125
      %p127 = scmp.ne.s32.totalorder %s116, %s119
      %p128 = scmp.eq.s32.totalorder %s33, 1
      %p129 = por %p127, %p128
      %p130 = scmp.ne.s32.totalorder %s119, %s120
      %p131 = scmp.eq.s32.totalorder %s33, 0
      %p132 = por %p130, %p131
      %p133 = scmp.ne.s32.totalorder %s119, %s120
      %p134 = scmp.eq.s32.totalorder %s34, 1
      %p135 = por %p133, %p134
      %p137 = scmp.ne.s32.totalorder %s120, %s136
      %p138 = scmp.eq.s32.totalorder %s34, 0
      %p139 = por %p137, %p138
      %s141 = sadd.s32 %s140, 1
      %p144 = scmp.eq.s32.totalorder %s28, 1
      %p145 = scmp.ne.s32.totalorder %s140, %s142
      %p146 = scmp.eq.s32.totalorder %s28, 0
      %p147 = por %p145, %p146
      %p148 = scmp.ne.s32.totalorder %s140, %s142
      %p149 = scmp.eq.s32.totalorder %s33, 1
      %p150 = por %p148, %p149
      %p151 = scmp.ne.s32.totalorder %s142, %s143
      %p152 = scmp.eq.s32.totalorder %s33, 0
      %p153 = por %p151, %p152
      %p154 = scmp.ne.s32.totalorder %s142, %s143
      %p155 = scmp.eq.s32.totalorder %s34, 1
      %p156 = por %p154, %p155
      %p158 = scmp.ne.s32.totalorder %s143, %s157
      %p159 = scmp.eq.s32.totalorder %s34, 0
      %p160 = por %p158, %p159
      %s162 = sadd.s32 %s161, 1
      %p165 = scmp.eq.s32.totalorder %s28, 1
      %p166 = scmp.ne.s32.totalorder %s161, %s163
      %p167 = scmp.eq.s32.totalorder %s28, 0
      %p168 = por %p166, %p167
      %p169 = scmp.ne.s32.totalorder %s161, %s163
      %p170 = scmp.eq.s32.totalorder %s33, 1
      %p171 = por %p169, %p170
      %p172 = scmp.ne.s32.totalorder %s163, %s164
      %p173 = scmp.eq.s32.totalorder %s33, 0
      %p174 = por %p172, %p173
      %p175 = scmp.ne.s32.totalorder %s163, %s164
      %p176 = scmp.eq.s32.totalorder %s34, 1
      %p177 = por %p175, %p176
      %p179 = scmp.ne.s32.totalorder %s164, %s178
      %p180 = scmp.eq.s32.totalorder %s34, 0
      %p181 = por %p179, %p180
      %s183 = sadd.s32 %s182, 1
      %p186 = scmp.eq.s32.totalorder %s28, 1
      %p187 = scmp.ne.s32.totalorder %s182, %s184
      %p188 = scmp.eq.s32.totalorder %s28, 0
      %p189 = por %p187, %p188
      %p190 = scmp.ne.s32.totalorder %s182, %s184
      %p191 = scmp.eq.s32.totalorder %s33, 1
      %p192 = por %p190, %p191
      %p193 = scmp.ne.s32.totalorder %s184, %s185
      %p194 = scmp.eq.s32.totalorder %s33, 0
      %p195 = por %p193, %p194
      %p196 = scmp.ne.s32.totalorder %s184, %s185
      %p197 = scmp.eq.s32.totalorder %s34, 1
      %p198 = por %p196, %p197
      %p200 = scmp.ne.s32.totalorder %s185, %s199
      %p201 = scmp.eq.s32.totalorder %s34, 0
      %p202 = por %p200, %p201
      %s204 = sadd.s32 %s203, 1
      %p207 = scmp.eq.s32.totalorder %s28, 1
      %p208 = scmp.ne.s32.totalorder %s203, %s205
      %p209 = scmp.eq.s32.totalorder %s28, 0
      %p210 = por %p208, %p209
      %p211 = scmp.ne.s32.totalorder %s203, %s205
      %p212 = scmp.eq.s32.totalorder %s33, 1
      %p213 = por %p211, %p212
      %p214 = scmp.ne.s32.totalorder %s205, %s206
      %p215 = scmp.eq.s32.totalorder %s33, 0
      %p216 = por %p214, %p215
      %p217 = scmp.ne.s32.totalorder %s205, %s206
      %p218 = scmp.eq.s32.totalorder %s34, 1
      %p219 = por %p217, %p218
      %p221 = scmp.ne.s32.totalorder %s206, %s220
      %p222 = scmp.eq.s32.totalorder %s34, 0
      %p223 = por %p221, %p222
      %s225 = sadd.s32 %s224, 1
      %p228 = scmp.eq.s32.totalorder %s28, 1
      %p229 = scmp.ne.s32.totalorder %s224, %s226
      %p230 = scmp.eq.s32.totalorder %s28, 0
      %p231 = por %p229, %p230
      %p232 = scmp.ne.s32.totalorder %s224, %s226
      %p233 = scmp.eq.s32.totalorder %s33, 1
      %p234 = por %p232, %p233
      %p235 = scmp.ne.s32.totalorder %s226, %s227
      %p236 = scmp.eq.s32.totalorder %s33, 0
      %p237 = por %p235, %p236
      %p238 = scmp.ne.s32.totalorder %s226, %s227
      %p239 = scmp.eq.s32.totalorder %s34, 1
      %p240 = por %p238, %p239
      %p242 = scmp.ne.s32.totalorder %s227, %s241
      %p243 = scmp.eq.s32.totalorder %s34, 0
      %p244 = por %p242, %p243
      %s245 = ssub.s32 %s28, %s35
      %p246 = scmp.eq.s32.totalorder %s245, 0
      %s248 = sadd.s32 %s247, 1
      %s249 = scalar_select %p246, %s247, %s248
      %p252 = pneg %p246
      %p253 = scmp.eq.s32.totalorder %s28, 1
      %p254 = por %p252, %p253
      %p255 = scmp.ne.s32.totalorder %s247, %s250
      %p256 = scmp.eq.s32.totalorder %s28, 0
      %p257 = por %p255, %p256
      %p258 = scmp.ne.s32.totalorder %s247, %s250
      %p259 = scmp.eq.s32.totalorder %s33, 1
      %p260 = por %p258, %p259
      %p261 = scmp.ne.s32.totalorder %s250, %s251
      %p262 = scmp.eq.s32.totalorder %s33, 0
      %p263 = por %p261, %p262
      %p264 = scmp.ne.s32.totalorder %s250, %s251
      %p265 = scmp.eq.s32.totalorder %s34, 1
      %p266 = por %p264, %p265
      %p268 = scmp.ne.s32.totalorder %s251, %s267
      %p269 = scmp.eq.s32.totalorder %s34, 0
      %p270 = por %p268, %p269
      %p271 = scmp.le.s32.totalorder 1, %s28
      %p272 = scmp.lt.s32.totalorder %s28, 3
      %p273 = pnand %p271, %p272
      %p274 = pneg %p273
      // Predicated region
      $region9: #{tpu_custom_call.1} parent=5 // pred_check
        _
      $region10: #{tpu_custom_call.1} parent=5 // pred_check_branch
        %276 = sbr.rel (%p273) target = $region12
      $region11: #{tpu_custom_call.1} parent=5 // pred_region
        %s277 = ssub.s32 %s28, 1
        // Predicated region
        $region13: #{tpu_custom_call.1} parent=11 // pred_check
          %p278 = pneg %p153
        $region14: #{tpu_custom_call.1} parent=11 // pred_check_branch
          %280 = sbr.rel (%p278) target = $region16
        $region15: #{tpu_custom_call.1} parent=11 // pred_region
          %s282 = ssub.s32 256, 256
          %283 = vsyncadd [#allocation9], %s282
          %s284 = sshll.u32 [#allocation10], 4
          %s285 = int_to_ptr.vmem [resolvable:$true] %s284
          %290 = dma.hbm_to_vmem [thread:$0]  %s4, 256, %s285, [#allocation9], 128, 128, 8
        $region16: #{tpu_custom_call.1} parent=11 // pred_fallthru
          _
        // Predicated region
        $region17: #{tpu_custom_call.1} parent=11 // pred_check
          %p291 = pneg %p174
        $region18: #{tpu_custom_call.1} parent=11 // pred_check_branch
          %293 = sbr.rel (%p291) target = $region20
        $region19: #{tpu_custom_call.1} parent=11 // pred_region
          _
        $region20: #{tpu_custom_call.1} parent=11 // pred_fallthru
          _
        // Predicated region
        $region21: #{tpu_custom_call.1} parent=11 // pred_check
          %p294 = pneg %p195
        $region22: #{tpu_custom_call.1} parent=11 // pred_check_branch
          %296 = sbr.rel (%p294) target = $region24
        $region23: #{tpu_custom_call.1} parent=11 // pred_region
          %s298 = ssub.s32 512, 512
          %299 = vsyncadd [#allocation12], %s298
          %s300 = sshll.u32 [#allocation11], 4
          %s301 = int_to_ptr.vmem [resolvable:$true] %s300
          %306 = dma.hbm_to_vmem [thread:$0]  %s6, 512, %s301, [#allocation12], 128, 128, 8
        $region24: #{tpu_custom_call.1} parent=11 // pred_fallthru
          _
        // Predicated region
        $region25: #{tpu_custom_call.1} parent=11 // pred_check
          %p307 = pneg %p216
        $region26: #{tpu_custom_call.1} parent=11 // pred_check_branch
          %309 = sbr.rel (%p307) target = $region28
        $region27: #{tpu_custom_call.1} parent=11 // pred_region
          %s311 = ssub.s32 512, 512
          %312 = vsyncadd [#allocation12], %s311
          %s313 = sshll.u32 [#allocation13], 4
          %s314 = int_to_ptr.vmem [resolvable:$true] %s313
          %319 = dma.hbm_to_vmem [thread:$0]  %s7, 512, %s314, [#allocation12], 128, 128, 8
        $region28: #{tpu_custom_call.1} parent=11 // pred_fallthru
          _
        // Predicated region
        $region29: #{tpu_custom_call.1} parent=11 // pred_check
          %p320 = pneg %p237
        $region30: #{tpu_custom_call.1} parent=11 // pred_check_branch
          %322 = sbr.rel (%p320) target = $region32
        $region31: #{tpu_custom_call.1} parent=11 // pred_region
          _
        $region32: #{tpu_custom_call.1} parent=11 // pred_fallthru
          _
      $region12: #{tpu_custom_call.1} parent=5 // pred_fallthru
        _
      %p323 = scmp.lt.s32.totalorder %s28, 2
      // Predicated region
      $region33: #{tpu_custom_call.1} parent=5 // pred_check
        %p324 = pneg %p323
      $region34: #{tpu_custom_call.1} parent=5 // pred_check_branch
        %326 = sbr.rel (%p324) target = $region36
      $region35: #{tpu_custom_call.1} parent=5 // pred_region
        // Predicated region
        $region37: #{tpu_custom_call.1} parent=35 // pred_check
          %p327 = pneg %p48
        $region38: #{tpu_custom_call.1} parent=35 // pred_check_branch
          %329 = sbr.rel (%p327) target = $region40
        $region39: #{tpu_custom_call.1} parent=35 // pred_region
          %s330 = sand.u32 %s38, 1
          %s331 = scalar_lea.sflag [#allocation3], %s330
          %s332 = sand.u32 %s38, 1
          %s333 = smul.addr %s332, 8
          %s334 = scalar_lea.vmem [#allocation2], %s333
          %s336 = ssub.s32 128, 128
          %337 = vsyncadd %s331, %s336
          %s338 = smul.addr %s28, 128
          %s339 = scalar_lea.hbm %s0, %s338
          %s341 = sshll.u32 %s334, 4
          %s342 = int_to_ptr.vmem [resolvable:$true] %s341
          %344 = dma.hbm_to_vmem [thread:$0]  %s339, 128, %s342, %s331
        $region40: #{tpu_custom_call.1} parent=35 // pred_fallthru
          _
        // Predicated region
        $region41: #{tpu_custom_call.1} parent=35 // pred_check
          %p345 = pneg %p74
        $region42: #{tpu_custom_call.1} parent=35 // pred_check_branch
          %347 = sbr.rel (%p345) target = $region44
        $region43: #{tpu_custom_call.1} parent=35 // pred_region
          %s348 = sand.u32 %s28, 1
          %s349 = scalar_lea.sflag [#allocation6], %s348
          %s350 = sand.u32 %s64, 1
          %s351 = smul.addr %s350, 8
          %s352 = scalar_lea.vmem [#allocation5], %s351
          %s354 = ssub.s32 128, 128
          %355 = vsyncadd %s349, %s354
          %s356 = smul.addr %s28, 128
          %s357 = scalar_lea.hbm %s1, %s356
          %s359 = sshll.u32 %s352, 4
          %s360 = int_to_ptr.vmem [resolvable:$true] %s359
          %362 = dma.hbm_to_vmem [thread:$0]  %s357, 128, %s360, %s349
        $region44: #{tpu_custom_call.1} parent=35 // pred_fallthru
          _
        // Predicated region
        $region45: #{tpu_custom_call.1} parent=35 // pred_check
          %p363 = pneg %p100
        $region46: #{tpu_custom_call.1} parent=35 // pred_check_branch
          %365 = sbr.rel (%p363) target = $region48
        $region47: #{tpu_custom_call.1} parent=35 // pred_region
          %s366 = sand.u32 %s28, 1
          %s367 = scalar_lea.sflag [#allocation6], %s366
          %s368 = sand.u32 %s90, 1
          %s369 = smul.addr %s368, 8
          %s370 = scalar_lea.vmem [#allocation7], %s369
          %s372 = ssub.s32 128, 128
          %373 = vsyncadd %s367, %s372
          %s374 = smul.addr %s28, 128
          %s375 = scalar_lea.hbm %s2, %s374
          %s377 = sshll.u32 %s370, 4
          %s378 = int_to_ptr.vmem [resolvable:$true] %s377
          %380 = dma.hbm_to_vmem [thread:$0]  %s375, 128, %s378, %s367
        $region48: #{tpu_custom_call.1} parent=35 // pred_fallthru
          _
        // Predicated region
        $region49: #{tpu_custom_call.1} parent=35 // pred_check
          %p381 = pneg %p126
        $region50: #{tpu_custom_call.1} parent=35 // pred_check_branch
          %383 = sbr.rel (%p381) target = $region52
        $region51: #{tpu_custom_call.1} parent=35 // pred_region
          %s384 = sand.u32 %s28, 1
          %s385 = scalar_lea.sflag [#allocation9], %s384
          %s386 = sand.u32 %s116, 1
          %s387 = smul.addr %s386, 8
          %s388 = scalar_lea.vmem [#allocation8], %s387
          %s390 = ssub.s32 128, 128
          %391 = vsyncadd %s385, %s390
          %s392 = smul.addr %s28, 128
          %s393 = scalar_lea.hbm %s3, %s392
          %s395 = sshll.u32 %s388, 4
          %s396 = int_to_ptr.vmem [resolvable:$true] %s395
          %398 = dma.hbm_to_vmem [thread:$0]  %s393, 128, %s396, %s385
        $region52: #{tpu_custom_call.1} parent=35 // pred_fallthru
          _
      $region36: #{tpu_custom_call.1} parent=5 // pred_fallthru
        _
      %p399 = scmp.le.s32.totalorder 1, %s28
      %p400 = scmp.lt.s32.totalorder %s28, 3
      %p401 = pnand %p399, %p400
      %p402 = pneg %p401
      // Predicated region
      $region53: #{tpu_custom_call.1} parent=5 // pred_check
        _
      $region54: #{tpu_custom_call.1} parent=5 // pred_check_branch
        %404 = sbr.rel (%p401) target = $region56
      $region55: #{tpu_custom_call.1} parent=5 // pred_region
        %s405 = ssub.s32 %s28, 1
        %s406 = sand.u32 %s41, 1
        %s407 = scalar_lea.sflag [#allocation3], %s406
        %s408 = sand.u32 %s41, 1
        %s409 = smul.addr %s408, 8
        %s410 = scalar_lea.vmem [#allocation2], %s409
        // Predicated region
        $region57: #{tpu_custom_call.1} parent=55 // pred_check
          %p411 = pneg %p54
        $region58: #{tpu_custom_call.1} parent=55 // pred_check_branch
          %413 = sbr.rel (%p411) target = $region60
        $region59: #{tpu_custom_call.1} parent=55 // pred_region
          %414 = dma.done %s407, 128
        $region60: #{tpu_custom_call.1} parent=55 // pred_fallthru
          _
        %s415 = sand.u32 %s33, 1
        %s416 = scalar_lea.sflag [#allocation6], %s415
        %s417 = sand.u32 %s67, 1
        %s418 = smul.addr %s417, 8
        %s419 = scalar_lea.vmem [#allocation5], %s418
        // Predicated region
        $region61: #{tpu_custom_call.1} parent=55 // pred_check
          %p420 = pneg %p80
        $region62: #{tpu_custom_call.1} parent=55 // pred_check_branch
          %422 = sbr.rel (%p420) target = $region64
        $region63: #{tpu_custom_call.1} parent=55 // pred_region
          %423 = dma.done %s416, 128
        $region64: #{tpu_custom_call.1} parent=55 // pred_fallthru
          _
        %s424 = sand.u32 %s33, 1
        %s425 = scalar_lea.sflag [#allocation6], %s424
        %s426 = sand.u32 %s93, 1
        %s427 = smul.addr %s426, 8
        %s428 = scalar_lea.vmem [#allocation7], %s427
        // Predicated region
        $region65: #{tpu_custom_call.1} parent=55 // pred_check
          %p429 = pneg %p106
        $region66: #{tpu_custom_call.1} parent=55 // pred_check_branch
          %431 = sbr.rel (%p429) target = $region68
        $region67: #{tpu_custom_call.1} parent=55 // pred_region
          %432 = dma.done %s425, 128
        $region68: #{tpu_custom_call.1} parent=55 // pred_fallthru
          _
        %s433 = sand.u32 %s33, 1
        %s434 = scalar_lea.sflag [#allocation9], %s433
        %s435 = sand.u32 %s119, 1
        %s436 = smul.addr %s435, 8
        %s437 = scalar_lea.vmem [#allocation8], %s436
        // Predicated region
        $region69: #{tpu_custom_call.1} parent=55 // pred_check
          %p438 = pneg %p132
        $region70: #{tpu_custom_call.1} parent=55 // pred_check_branch
          %440 = sbr.rel (%p438) target = $region72
        $region71: #{tpu_custom_call.1} parent=55 // pred_region
          %441 = dma.done %s434, 128
        $region72: #{tpu_custom_call.1} parent=55 // pred_fallthru
          _
        // Predicated region
        $region73: #{tpu_custom_call.1} parent=55 // pred_check
          %p442 = pneg %p153
        $region74: #{tpu_custom_call.1} parent=55 // pred_check_branch
          %444 = sbr.rel (%p442) target = $region76
        $region75: #{tpu_custom_call.1} parent=55 // pred_region
          %445 = dma.done [#allocation9], 256
        $region76: #{tpu_custom_call.1} parent=55 // pred_fallthru
          _
        // Predicated region
        $region77: #{tpu_custom_call.1} parent=55 // pred_check
          %p446 = pneg %p195
        $region78: #{tpu_custom_call.1} parent=55 // pred_check_branch
          %448 = sbr.rel (%p446) target = $region80
        $region79: #{tpu_custom_call.1} parent=55 // pred_region
          %449 = dma.done [#allocation12], 512
        $region80: #{tpu_custom_call.1} parent=55 // pred_fallthru
          _
        // Predicated region
        $region81: #{tpu_custom_call.1} parent=55 // pred_check
          %p450 = pneg %p216
        $region82: #{tpu_custom_call.1} parent=55 // pred_check_branch
          %452 = sbr.rel (%p450) target = $region84
        $region83: #{tpu_custom_call.1} parent=55 // pred_region
          %453 = dma.done [#allocation12], 512
        $region84: #{tpu_custom_call.1} parent=55 // pred_fallthru
          _
        %s454 = sand.u32 %s41, 1
        %s455 = scalar_lea.sflag [#allocation3], %s454
        %s456 = sand.u32 %s41, 1
        %s457 = smul.addr %s456, 8
        %s458 = scalar_lea.vmem [#allocation2], %s457
        %p459 = pneg %p54
        %p460 = pneg %p51
        %s461 = sand.u32 %s33, 1
        %s462 = scalar_lea.sflag [#allocation6], %s461
        %s463 = sand.u32 %s67, 1
        %s464 = smul.addr %s463, 8
        %s465 = scalar_lea.vmem [#allocation5], %s464
        %p466 = pneg %p80
        %p467 = pneg %p77
        %s468 = sand.u32 %s33, 1
        %s469 = scalar_lea.sflag [#allocation6], %s468
        %s470 = sand.u32 %s93, 1
        %s471 = smul.addr %s470, 8
        %s472 = scalar_lea.vmem [#allocation7], %s471
        %p473 = pneg %p106
        %p474 = pneg %p103
        %s475 = sand.u32 %s33, 1
        %s476 = scalar_lea.sflag [#allocation9], %s475
        %s477 = sand.u32 %s119, 1
        %s478 = smul.addr %s477, 8
        %s479 = scalar_lea.vmem [#allocation8], %s478
        %p480 = pneg %p132
        %p481 = pneg %p129
        %p482 = pneg %p153
        %p483 = pneg %p150
        %p484 = pneg %p174
        %p485 = pneg %p171
        %p486 = pneg %p195
        %p487 = pneg %p192
        %p488 = pneg %p216
        %p489 = pneg %p213
        %p490 = pneg %p237
        %p491 = pneg %p234
        %p492 = pneg %p263
        %p493 = pneg %p260
        %s494 = sand.u32 %s250, 1
        %s495 = scalar_lea.sflag [#allocation4], %s494
        %s496 = sand.u32 %s250, 1
        %s497 = smul.addr %s496, 8
        %s498 = scalar_lea.vmem [#allocation14], %s497
        %v499 = vld [vmem:[%s410] sm:$0xff]
        %v500 = vld [vmem:[%s419] sm:$0xff]
        %v501 = vld [vmem:[%s428] sm:$0xff]
        %v502 = vld [vmem:[%s437] sm:$0xff]
        %v503 = vld [vmem:[#allocation10] sm:$0xff]
        %v504 = vld [vmem:[#allocation10 + $0x8] sm:$0xff]
        %vm505 = vcmask 130048
        %v507 = vsel %vm505, %v502, 0
        %509 = vmatprep.subr.mxu0 0.0
        %510 = vmatpush1.msra.mxu0 %v503
        %511 = vmatprep.subr.mxu0 0.0
        %512 = vmatpush1.msra.mxu0 %v504
        %513 = vmatprep.subr.mxu0 0.0
        %514 = vmatpush1.msra.mxu0 0.0
        %515 = vmatprep.subr.mxu0 0.0
        %516 = vmatpush1.msra.mxu0 0.0
        %517 = vmatprep.subr.mxu0 0.0
        %518 = vmatpush1.msra.mxu0 0.0
        %519 = vmatprep.subr.mxu0 0.0
        %520 = vmatpush1.msra.mxu0 0.0
        %521 = vmatprep.subr.mxu0 0.0
        %522 = vmatpush1.msra.mxu0 0.0
        %523 = vmatprep.subr.mxu0 0.0
        %524 = vmatpush1.msra.mxu0 0.0
        %525 = vmatprep.subr.mxu0 0.0
        %526 = vmatpush1.msra.mxu0 0.0
        %527 = vmatprep.subr.mxu0 0.0
        %528 = vmatpush1.msra.mxu0 0.0
        %529 = vmatprep.subr.mxu0 0.0
        %530 = vmatpush1.msra.mxu0 0.0
        %531 = vmatprep.subr.mxu0 0.0
        %532 = vmatpush1.msra.mxu0 0.0
        %533 = vmatprep.subr.mxu0 0.0
        %534 = vmatpush1.msra.mxu0 0.0
        %535 = vmatprep.subr.mxu0 0.0
        %536 = vmatpush1.msra.mxu0 0.0
        %537 = vmatprep.subr.mxu0 0.0
        %538 = vmatpush1.msra.mxu0 0.0
        %539 = vmatprep.subr.mxu0 0.0
        %540 = vmatpush1.msra.mxu0 0.0
        %541 = vmatprep.subr.mxu0 0.0
        %542 = vmatpush1.msra.mxu0 0.0
        %543 = vmatprep.subr.mxu0 0.0
        %544 = vmatpush1.msra.mxu0 0.0
        %545 = vmatprep.subr.mxu0 0.0
        %546 = vmatpush1.msra.mxu0 0.0
        %547 = vmatprep.subr.mxu0 0.0
        %548 = vmatpush1.msra.mxu0 0.0
        %549 = vmatprep.subr.mxu0 0.0
        %550 = vmatpush1.msra.mxu0 0.0
        %551 = vmatprep.subr.mxu0 0.0
        %552 = vmatpush1.msra.mxu0 0.0
        %553 = vmatprep.subr.mxu0 0.0
        %554 = vmatpush1.msra.mxu0 0.0
        %555 = vmatprep.subr.mxu0 0.0
        %556 = vmatpush1.msra.mxu0 0.0
        %557 = vmatprep.subr.mxu0 0.0
        %558 = vmatpush1.msra.mxu0 0.0
        %559 = vmatprep.subr.mxu0 0.0
        %560 = vmatpush1.msra.mxu0 0.0
        %561 = vmatprep.subr.mxu0 0.0
        %562 = vmatpush1.msra.mxu0 0.0
        %563 = vmatprep.subr.mxu0 0.0
        %564 = vmatpush1.msra.mxu0 0.0
        %565 = vmatprep.subr.mxu0 0.0
        %566 = vmatpush1.msra.mxu0 0.0
        %567 = vmatprep.subr.mxu0 0.0
        %568 = vmatpush1.msra.mxu0 0.0
        %569 = vmatprep.subr.mxu0 0.0
        %570 = vmatpush1.msra.mxu0 0.0
        %571 = vmatprep.subr.mxu0 0.0
        %572 = vmatpush1.msra.mxu0 0.0
        %573 = vmatprep.mubr.f32.mxu0 0.0
        %574 = vmatmul.mubr.f32.gmra.mrb[0].mxu0 %v507
        %v575 = vpop.f32.mrb[0].mxu0
        %v576 = vadd.f32 0.0, %v575
        %v577 = vpop.f32.mrb[0].mxu0
        %578 = vdwg.mxu0
        %v579 = vld [vmem:[%s5] sm:$0xf]
        %v580 = vlaneseq
        %v581 = vshrl.u32 %v580, 7
        %v582 = vsub.s32 0, %v581
        %v583 = vrot.slane %v579, %v582
        %v584 = vmul.f32 %v500, %v583
        %vm585 = vcmask 261120
        %v586 = vsel %vm585, %v584, 0.0
        %587 = vadd.xlane.f32.xlu0 %v586
        %v588 = vpop.xlane.xlu0 %587
        %v589 = vlaneseq
        %v590 = vshrl.u32 %v589, 7
        %v591 = vsub.s32 1, %v590
        %v592 = vrot.slane %v579, %v591
        %v593 = vmul.f32 %v576, %v592
        %v594 = vsel %vm585, %v593, 0.0
        %595 = vadd.xlane.f32.xlu0 %v594
        %v596 = vpop.xlane.xlu0 %595
        %v597 = vadd.f32 %v588, %v596
        %v598 = vxor.u32 %v597, 2147483648
        %v599 = vmul.f32 %v598, 1.442695
        %v600 = vpow.pop %v599
        %v601 = vadd.f32 %v600, 1.0
        %v602 = vrcp.pop %v601
        %v603 = vmul.f32 1.0, %v602
        %v604 = vlaneseq
        %v605 = vshrl.u32 %v604, 7
        %v606 = vsub.s32 2, %v605
        %v607 = vrot.slane %v579, %v606
        %v608 = vmul.f32 %v501, %v607
        %v609 = vsel %vm585, %v608, 0.0
        %610 = vadd.xlane.f32.xlu0 %v609
        %v611 = vpop.xlane.xlu0 %610
        %v612 = vlaneseq
        %v613 = vshrl.u32 %v612, 7
        %v614 = vsub.s32 3, %v613
        %v615 = vrot.slane %v579, %v614
        %617 = vrot.lane.b32.xlu0 %v615, 32
        %v618 = vpop.permute.xlu0 %617
        %v620 = vmul.f32 %v576, %v618
        %622 = vrot.lane.b32.xlu0 %v620, 96
        %v623 = vpop.permute.xlu0 %622
        %v625 = vsel %vm585, %v623, 0.0
        %626 = vadd.xlane.f32.xlu0 %v625
        %v627 = vpop.xlane.xlu0 %626
        %v628 = vadd.f32 %v611, %v627
        %v629 = vxor.u32 %v628, 2147483648
        %v630 = vmul.f32 %v629, 1.442695
        %v631 = vpow.pop %v630
        %v632 = vadd.f32 %v631, 1.0
        %v633 = vrcp.pop %v632
        %v634 = vmul.f32 1.0, %v633
        %v635 = vsub.f32 1.0, %v603
        %v636 = vmul.f32 %v635, %v500
        %v637 = vmul.f32 %v603, %v576
        %v638 = vadd.f32 %v636, %v637
        %v639 = vsub.f32 1.0, %v634
        %v640 = vmul.f32 %v639, %v501
        %v641 = vmul.f32 %v634, %v576
        %643 = vrot.lane.b32.xlu0 %v641, 96
        %v644 = vpop.permute.xlu0 %643
        %v646 = vadd.f32 %v640, %v644
        %v647 = vld [vmem:[%s8] sm:$0x1]
        %v648 = vld [vmem:[#allocation11] sm:$0xff]
        %v649 = vld [vmem:[#allocation11 + $0x8] sm:$0xff]
        %v650 = vld [vmem:[#allocation11 + $0x10] sm:$0xff]
        %v651 = vld [vmem:[#allocation11 + $0x18] sm:$0xff]
        %v653 = vlaneseq
        %v654 = vshrl.u32 %v653, 7
        %v655 = vsub.s32 0, %v654
        %v656 = vrot.slane %v647, %v655
        %v659 = vsel %vm585, %v499, 0
        %661 = vmatprep.subr.mxu0 0.0
        %662 = vmatpush1.msra.mxu0 %v648
        %663 = vmatprep.subr.mxu0 0.0
        %664 = vmatpush1.msra.mxu0 %v649
        %665 = vmatprep.subr.mxu0 0.0
        %666 = vmatpush1.msra.mxu0 %v650
        %667 = vmatprep.subr.mxu0 0.0
        %668 = vmatpush1.msra.mxu0 %v651
        %669 = vmatprep.subr.mxu0 0.0
        %670 = vmatpush1.msra.mxu0 0.0
        %671 = vmatprep.subr.mxu0 0.0
        %672 = vmatpush1.msra.mxu0 0.0
        %673 = vmatprep.subr.mxu0 0.0
        %674 = vmatpush1.msra.mxu0 0.0
        %675 = vmatprep.subr.mxu0 0.0
        %676 = vmatpush1.msra.mxu0 0.0
        %677 = vmatprep.subr.mxu0 0.0
        %678 = vmatpush1.msra.mxu0 0.0
        %679 = vmatprep.subr.mxu0 0.0
        %680 = vmatpush1.msra.mxu0 0.0
        %681 = vmatprep.subr.mxu0 0.0
        %682 = vmatpush1.msra.mxu0 0.0
        %683 = vmatprep.subr.mxu0 0.0
        %684 = vmatpush1.msra.mxu0 0.0
        %685 = vmatprep.subr.mxu0 0.0
        %686 = vmatpush1.msra.mxu0 0.0
        %687 = vmatprep.subr.mxu0 0.0
        %688 = vmatpush1.msra.mxu0 0.0
        %689 = vmatprep.subr.mxu0 0.0
        %690 = vmatpush1.msra.mxu0 0.0
        %691 = vmatprep.subr.mxu0 0.0
        %692 = vmatpush1.msra.mxu0 0.0
        %693 = vmatprep.subr.mxu0 0.0
        %694 = vmatpush1.msra.mxu0 0.0
        %695 = vmatprep.subr.mxu0 0.0
        %696 = vmatpush1.msra.mxu0 0.0
        %697 = vmatprep.subr.mxu0 0.0
        %698 = vmatpush1.msra.mxu0 0.0
        %699 = vmatprep.subr.mxu0 0.0
        %700 = vmatpush1.msra.mxu0 0.0
        %701 = vmatprep.subr.mxu0 0.0
        %702 = vmatpush1.msra.mxu0 0.0
        %703 = vmatprep.subr.mxu0 0.0
        %704 = vmatpush1.msra.mxu0 0.0
        %705 = vmatprep.subr.mxu0 0.0
        %706 = vmatpush1.msra.mxu0 0.0
        %707 = vmatprep.subr.mxu0 0.0
        %708 = vmatpush1.msra.mxu0 0.0
        %709 = vmatprep.subr.mxu0 0.0
        %710 = vmatpush1.msra.mxu0 0.0
        %711 = vmatprep.subr.mxu0 0.0
        %712 = vmatpush1.msra.mxu0 0.0
        %713 = vmatprep.subr.mxu0 0.0
        %714 = vmatpush1.msra.mxu0 0.0
        %715 = vmatprep.subr.mxu0 0.0
        %716 = vmatpush1.msra.mxu0 0.0
        %717 = vmatprep.subr.mxu0 0.0
        %718 = vmatpush1.msra.mxu0 0.0
        %719 = vmatprep.subr.mxu0 0.0
        %720 = vmatpush1.msra.mxu0 0.0
        %721 = vmatprep.subr.mxu0 0.0
        %722 = vmatpush1.msra.mxu0 0.0
        %723 = vmatprep.subr.mxu0 0.0
        %724 = vmatpush1.msra.mxu0 0.0
        %725 = vmatprep.mubr.f32.mxu0 0.0
        %726 = vmatmul.mubr.f32.gmra.mrb[0].mxu0 %v659
        %v727 = vpop.f32.mrb[0].mxu0
        %v728 = vadd.f32 %v656, %v727
        %v729 = vpop.f32.mrb[0].mxu0
        %730 = vdwg.mxu0
        %735 = vrot.lane.b32.xlu0 %v648, 96
        %v736 = vpop.permute.xlu0 %735
        %737 = vrot.lane.b32.xlu0 %v649, 96
        %v738 = vpop.permute.xlu0 %737
        %739 = vrot.lane.b32.xlu0 %v650, 96
        %v740 = vpop.permute.xlu0 %739
        %741 = vrot.lane.b32.xlu0 %v651, 96
        %v742 = vpop.permute.xlu0 %741
        %747 = vrot.lane.b32.xlu0 %v656, 96
        %v748 = vpop.permute.xlu0 %747
        %v751 = vsel %vm585, %v638, 0
        %753 = vmatprep.subr.mxu0 0.0
        %754 = vmatpush1.msra.mxu0 %v736
        %755 = vmatprep.subr.mxu0 0.0
        %756 = vmatpush1.msra.mxu0 %v738
        %757 = vmatprep.subr.mxu0 0.0
        %758 = vmatpush1.msra.mxu0 %v740
        %759 = vmatprep.subr.mxu0 0.0
        %760 = vmatpush1.msra.mxu0 %v742
        %761 = vmatprep.subr.mxu0 0.0
        %762 = vmatpush1.msra.mxu0 0.0
        %763 = vmatprep.subr.mxu0 0.0
        %764 = vmatpush1.msra.mxu0 0.0
        %765 = vmatprep.subr.mxu0 0.0
        %766 = vmatpush1.msra.mxu0 0.0
        %767 = vmatprep.subr.mxu0 0.0
        %768 = vmatpush1.msra.mxu0 0.0
        %769 = vmatprep.subr.mxu0 0.0
        %770 = vmatpush1.msra.mxu0 0.0
        %771 = vmatprep.subr.mxu0 0.0
        %772 = vmatpush1.msra.mxu0 0.0
        %773 = vmatprep.subr.mxu0 0.0
        %774 = vmatpush1.msra.mxu0 0.0
        %775 = vmatprep.subr.mxu0 0.0
        %776 = vmatpush1.msra.mxu0 0.0
        %777 = vmatprep.subr.mxu0 0.0
        %778 = vmatpush1.msra.mxu0 0.0
        %779 = vmatprep.subr.mxu0 0.0
        %780 = vmatpush1.msra.mxu0 0.0
        %781 = vmatprep.subr.mxu0 0.0
        %782 = vmatpush1.msra.mxu0 0.0
        %783 = vmatprep.subr.mxu0 0.0
        %784 = vmatpush1.msra.mxu0 0.0
        %785 = vmatprep.subr.mxu0 0.0
        %786 = vmatpush1.msra.mxu0 0.0
        %787 = vmatprep.subr.mxu0 0.0
        %788 = vmatpush1.msra.mxu0 0.0
        %789 = vmatprep.subr.mxu0 0.0
        %790 = vmatpush1.msra.mxu0 0.0
        %791 = vmatprep.subr.mxu0 0.0
        %792 = vmatpush1.msra.mxu0 0.0
        %793 = vmatprep.subr.mxu0 0.0
        %794 = vmatpush1.msra.mxu0 0.0
        %795 = vmatprep.subr.mxu0 0.0
        %796 = vmatpush1.msra.mxu0 0.0
        %797 = vmatprep.subr.mxu0 0.0
        %798 = vmatpush1.msra.mxu0 0.0
        %799 = vmatprep.subr.mxu0 0.0
        %800 = vmatpush1.msra.mxu0 0.0
        %801 = vmatprep.subr.mxu0 0.0
        %802 = vmatpush1.msra.mxu0 0.0
        %803 = vmatprep.subr.mxu0 0.0
        %804 = vmatpush1.msra.mxu0 0.0
        %805 = vmatprep.subr.mxu0 0.0
        %806 = vmatpush1.msra.mxu0 0.0
        %807 = vmatprep.subr.mxu0 0.0
        %808 = vmatpush1.msra.mxu0 0.0
        %809 = vmatprep.subr.mxu0 0.0
        %810 = vmatpush1.msra.mxu0 0.0
        %811 = vmatprep.subr.mxu0 0.0
        %812 = vmatpush1.msra.mxu0 0.0
        %813 = vmatprep.subr.mxu0 0.0
        %814 = vmatpush1.msra.mxu0 0.0
        %815 = vmatprep.subr.mxu0 0.0
        %816 = vmatpush1.msra.mxu0 0.0
        %817 = vmatprep.mubr.f32.mxu0 0.0
        %818 = vmatmul.mubr.f32.gmra.mrb[0].mxu0 %v751
        %v819 = vpop.f32.mrb[0].mxu0
        %v820 = vadd.f32 %v748, %v819
        %v821 = vpop.f32.mrb[0].mxu0
        %822 = vdwg.mxu0
        %823 = vrot.lane.b32.xlu0 %v648, 64
        %v824 = vpop.permute.xlu0 %823
        %825 = vrot.lane.b32.xlu0 %v649, 64
        %v826 = vpop.permute.xlu0 %825
        %827 = vrot.lane.b32.xlu0 %v650, 64
        %v828 = vpop.permute.xlu0 %827
        %829 = vrot.lane.b32.xlu0 %v651, 64
        %v830 = vpop.permute.xlu0 %829
        %835 = vrot.lane.b32.xlu0 %v656, 64
        %v836 = vpop.permute.xlu0 %835
        %v839 = vsel %vm585, %v646, 0
        %841 = vmatprep.subr.mxu0 0.0
        %842 = vmatpush1.msra.mxu0 %v824
        %843 = vmatprep.subr.mxu0 0.0
        %844 = vmatpush1.msra.mxu0 %v826
        %845 = vmatprep.subr.mxu0 0.0
        %846 = vmatpush1.msra.mxu0 %v828
        %847 = vmatprep.subr.mxu0 0.0
        %848 = vmatpush1.msra.mxu0 %v830
        %849 = vmatprep.subr.mxu0 0.0
        %850 = vmatpush1.msra.mxu0 0.0
        %851 = vmatprep.subr.mxu0 0.0
        %852 = vmatpush1.msra.mxu0 0.0
        %853 = vmatprep.subr.mxu0 0.0
        %854 = vmatpush1.msra.mxu0 0.0
        %855 = vmatprep.subr.mxu0 0.0
        %856 = vmatpush1.msra.mxu0 0.0
        %857 = vmatprep.subr.mxu0 0.0
        %858 = vmatpush1.msra.mxu0 0.0
        %859 = vmatprep.subr.mxu0 0.0
        %860 = vmatpush1.msra.mxu0 0.0
        %861 = vmatprep.subr.mxu0 0.0
        %862 = vmatpush1.msra.mxu0 0.0
        %863 = vmatprep.subr.mxu0 0.0
        %864 = vmatpush1.msra.mxu0 0.0
        %865 = vmatprep.subr.mxu0 0.0
        %866 = vmatpush1.msra.mxu0 0.0
        %867 = vmatprep.subr.mxu0 0.0
        %868 = vmatpush1.msra.mxu0 0.0
        %869 = vmatprep.subr.mxu0 0.0
        %870 = vmatpush1.msra.mxu0 0.0
        %871 = vmatprep.subr.mxu0 0.0
        %872 = vmatpush1.msra.mxu0 0.0
        %873 = vmatprep.subr.mxu0 0.0
        %874 = vmatpush1.msra.mxu0 0.0
        %875 = vmatprep.subr.mxu0 0.0
        %876 = vmatpush1.msra.mxu0 0.0
        %877 = vmatprep.subr.mxu0 0.0
        %878 = vmatpush1.msra.mxu0 0.0
        %879 = vmatprep.subr.mxu0 0.0
        %880 = vmatpush1.msra.mxu0 0.0
        %881 = vmatprep.subr.mxu0 0.0
        %882 = vmatpush1.msra.mxu0 0.0
        %883 = vmatprep.subr.mxu0 0.0
        %884 = vmatpush1.msra.mxu0 0.0
        %885 = vmatprep.subr.mxu0 0.0
        %886 = vmatpush1.msra.mxu0 0.0
        %887 = vmatprep.subr.mxu0 0.0
        %888 = vmatpush1.msra.mxu0 0.0
        %889 = vmatprep.subr.mxu0 0.0
        %890 = vmatpush1.msra.mxu0 0.0
        %891 = vmatprep.subr.mxu0 0.0
        %892 = vmatpush1.msra.mxu0 0.0
        %893 = vmatprep.subr.mxu0 0.0
        %894 = vmatpush1.msra.mxu0 0.0
        %895 = vmatprep.subr.mxu0 0.0
        %896 = vmatpush1.msra.mxu0 0.0
        %897 = vmatprep.subr.mxu0 0.0
        %898 = vmatpush1.msra.mxu0 0.0
        %899 = vmatprep.subr.mxu0 0.0
        %900 = vmatpush1.msra.mxu0 0.0
        %901 = vmatprep.subr.mxu0 0.0
        %902 = vmatpush1.msra.mxu0 0.0
        %903 = vmatprep.subr.mxu0 0.0
        %904 = vmatpush1.msra.mxu0 0.0
        %905 = vmatprep.mubr.f32.mxu0 0.0
        %906 = vmatmul.mubr.f32.gmra.mrb[0].mxu0 %v839
        %v907 = vpop.f32.mrb[0].mxu0
        %v908 = vadd.f32 %v836, %v907
        %v909 = vpop.f32.mrb[0].mxu0
        %910 = vdwg.mxu0
        %v912 = vsel %vm585, %v728, 0
        %v915 = vsel %vm585, %v820, 0
        %917 = vmatprep.subr.mxu0 0.0
        %918 = vmatpush1.xpose.msra.mxu0 %v915
        %919 = vmatprep.subr.mxu0 0.0
        %920 = vmatpush1.xpose.msra.mxu0 0.0
        %921 = vmatprep.subr.mxu0 0.0
        %922 = vmatpush1.xpose.msra.mxu0 0.0
        %923 = vmatprep.subr.mxu0 0.0
        %924 = vmatpush1.xpose.msra.mxu0 0.0
        %925 = vmatprep.subr.mxu0 0.0
        %926 = vmatpush1.xpose.msra.mxu0 0.0
        %927 = vmatprep.subr.mxu0 0.0
        %928 = vmatpush1.xpose.msra.mxu0 0.0
        %929 = vmatprep.subr.mxu0 0.0
        %930 = vmatpush1.xpose.msra.mxu0 0.0
        %931 = vmatprep.subr.mxu0 0.0
        %932 = vmatpush1.xpose.msra.mxu0 0.0
        %933 = vmatprep.subr.mxu0 0.0
        %934 = vmatpush1.xpose.msra.mxu0 0.0
        %935 = vmatprep.subr.mxu0 0.0
        %936 = vmatpush1.xpose.msra.mxu0 0.0
        %937 = vmatprep.subr.mxu0 0.0
        %938 = vmatpush1.xpose.msra.mxu0 0.0
        %939 = vmatprep.subr.mxu0 0.0
        %940 = vmatpush1.xpose.msra.mxu0 0.0
        %941 = vmatprep.subr.mxu0 0.0
        %942 = vmatpush1.xpose.msra.mxu0 0.0
        %943 = vmatprep.subr.mxu0 0.0
        %944 = vmatpush1.xpose.msra.mxu0 0.0
        %945 = vmatprep.subr.mxu0 0.0
        %946 = vmatpush1.xpose.msra.mxu0 0.0
        %947 = vmatprep.subr.mxu0 0.0
        %948 = vmatpush1.xpose.msra.mxu0 0.0
        %949 = vmatprep.subr.mxu0 0.0
        %950 = vmatpush1.xpose.msra.mxu0 0.0
        %951 = vmatprep.subr.mxu0 0.0
        %952 = vmatpush1.xpose.msra.mxu0 0.0
        %953 = vmatprep.subr.mxu0 0.0
        %954 = vmatpush1.xpose.msra.mxu0 0.0
        %955 = vmatprep.subr.mxu0 0.0
        %956 = vmatpush1.xpose.msra.mxu0 0.0
        %957 = vmatprep.subr.mxu0 0.0
        %958 = vmatpush1.xpose.msra.mxu0 0.0
        %959 = vmatprep.subr.mxu0 0.0
        %960 = vmatpush1.xpose.msra.mxu0 0.0
        %961 = vmatprep.subr.mxu0 0.0
        %962 = vmatpush1.xpose.msra.mxu0 0.0
        %963 = vmatprep.subr.mxu0 0.0
        %964 = vmatpush1.xpose.msra.mxu0 0.0
        %965 = vmatprep.subr.mxu0 0.0
        %966 = vmatpush1.xpose.msra.mxu0 0.0
        %967 = vmatprep.subr.mxu0 0.0
        %968 = vmatpush1.xpose.msra.mxu0 0.0
        %969 = vmatprep.subr.mxu0 0.0
        %970 = vmatpush1.xpose.msra.mxu0 0.0
        %971 = vmatprep.subr.mxu0 0.0
        %972 = vmatpush1.xpose.msra.mxu0 0.0
        %973 = vmatprep.subr.mxu0 0.0
        %974 = vmatpush1.xpose.msra.mxu0 0.0
        %975 = vmatprep.subr.mxu0 0.0
        %976 = vmatpush1.xpose.msra.mxu0 0.0
        %977 = vmatprep.subr.mxu0 0.0
        %978 = vmatpush1.xpose.msra.mxu0 0.0
        %979 = vmatprep.subr.mxu0 0.0
        %980 = vmatpush1.xpose.msra.mxu0 0.0
        %981 = vmatprep.mubr.f32.mxu0 0.0
        %982 = vmatmul.mubr.f32.gmra.mrb[0].mxu0 %v912
        %v983 = vpop.f32.mrb[0].mxu0
        %v984 = vadd.f32 0.0, %v983
        %v985 = vpop.f32.mrb[0].mxu0
        %986 = vdwg.mxu0
        %v987 = vmul.f32 %v984, 0.17677669
        %vm988 = vcmask 64512
        %v989 = vsel %vm988, %v987, -inf
        %990 = vmax.xlane.f32.xlu0 %v989
        %v991 = vpop.xlane.xlu0 %990
        %v992 = vsub.f32 %v987, %v991
        %v993 = vmul.f32 %v992, 1.442695
        %v994 = vpow.pop %v993
        %v995 = vsel %vm988, %v994, 0.0
        %996 = vadd.xlane.f32.xlu0 %v995
        %v997 = vpop.xlane.xlu0 %996
        %v998 = vrcp.pop %v997
        %v999 = vmul.f32 %v994, %v998
        %v1001 = vsel %vm988, %v999, 0
        %1003 = vmatprep.subr.mxu0 0.0
        %1004 = vmatpush1.msra.mxu0 %v908
        %1005 = vmatprep.subr.mxu0 0.0
        %1006 = vmatpush1.msra.mxu0 0.0
        %1007 = vmatprep.subr.mxu0 0.0
        %1008 = vmatpush1.msra.mxu0 0.0
        %1009 = vmatprep.subr.mxu0 0.0
        %1010 = vmatpush1.msra.mxu0 0.0
        %1011 = vmatprep.subr.mxu0 0.0
        %1012 = vmatpush1.msra.mxu0 0.0
        %1013 = vmatprep.subr.mxu0 0.0
        %1014 = vmatpush1.msra.mxu0 0.0
        %1015 = vmatprep.subr.mxu0 0.0
        %1016 = vmatpush1.msra.mxu0 0.0
        %1017 = vmatprep.subr.mxu0 0.0
        %1018 = vmatpush1.msra.mxu0 0.0
        %1019 = vmatprep.subr.mxu0 0.0
        %1020 = vmatpush1.msra.mxu0 0.0
        %1021 = vmatprep.subr.mxu0 0.0
        %1022 = vmatpush1.msra.mxu0 0.0
        %1023 = vmatprep.subr.mxu0 0.0
        %1024 = vmatpush1.msra.mxu0 0.0
        %1025 = vmatprep.subr.mxu0 0.0
        %1026 = vmatpush1.msra.mxu0 0.0
        %1027 = vmatprep.subr.mxu0 0.0
        %1028 = vmatpush1.msra.mxu0 0.0
        %1029 = vmatprep.subr.mxu0 0.0
        %1030 = vmatpush1.msra.mxu0 0.0
        %1031 = vmatprep.subr.mxu0 0.0
        %1032 = vmatpush1.msra.mxu0 0.0
        %1033 = vmatprep.subr.mxu0 0.0
        %1034 = vmatpush1.msra.mxu0 0.0
        %1035 = vmatprep.subr.mxu0 0.0
        %1036 = vmatpush1.msra.mxu0 0.0
        %1037 = vmatprep.subr.mxu0 0.0
        %1038 = vmatpush1.msra.mxu0 0.0
        %1039 = vmatprep.subr.mxu0 0.0
        %1040 = vmatpush1.msra.mxu0 0.0
        %1041 = vmatprep.subr.mxu0 0.0
        %1042 = vmatpush1.msra.mxu0 0.0
        %1043 = vmatprep.subr.mxu0 0.0
        %1044 = vmatpush1.msra.mxu0 0.0
        %1045 = vmatprep.subr.mxu0 0.0
        %1046 = vmatpush1.msra.mxu0 0.0
        %1047 = vmatprep.subr.mxu0 0.0
        %1048 = vmatpush1.msra.mxu0 0.0
        %1049 = vmatprep.subr.mxu0 0.0
        %1050 = vmatpush1.msra.mxu0 0.0
        %1051 = vmatprep.subr.mxu0 0.0
        %1052 = vmatpush1.msra.mxu0 0.0
        %1053 = vmatprep.subr.mxu0 0.0
        %1054 = vmatpush1.msra.mxu0 0.0
        %1055 = vmatprep.subr.mxu0 0.0
        %1056 = vmatpush1.msra.mxu0 0.0
        %1057 = vmatprep.subr.mxu0 0.0
        %1058 = vmatpush1.msra.mxu0 0.0
        %1059 = vmatprep.subr.mxu0 0.0
        %1060 = vmatpush1.msra.mxu0 0.0
        %1061 = vmatprep.subr.mxu0 0.0
        %1062 = vmatpush1.msra.mxu0 0.0
        %1063 = vmatprep.subr.mxu0 0.0
        %1064 = vmatpush1.msra.mxu0 0.0
        %1065 = vmatprep.subr.mxu0 0.0
        %1066 = vmatpush1.msra.mxu0 0.0
        %1067 = vmatprep.mubr.f32.mxu0 0.0
        %1068 = vmatmul.mubr.f32.gmra.mrb[0].mxu0 %v1001
        %v1069 = vpop.f32.mrb[0].mxu0
        %v1070 = vadd.f32 0.0, %v1069
        %v1071 = vpop.f32.mrb[0].mxu0
        %1072 = vdwg.mxu0
        %v1073 = vld [vmem:[#allocation13] sm:$0xff]
        %v1074 = vld [vmem:[#allocation13 + $0x8] sm:$0xff]
        %v1075 = vld [vmem:[#allocation13 + $0x10] sm:$0xff]
        %v1076 = vld [vmem:[#allocation13 + $0x18] sm:$0xff]
        %1077 = vrot.lane.b32.xlu0 %v656, 32
        %v1078 = vpop.permute.xlu0 %1077
        %v1081 = vsel %vm585, %v1070, 0
        %1083 = vmatprep.subr.mxu0 0.0
        %1084 = vmatpush1.msra.mxu0 %v1073
        %1085 = vmatprep.subr.mxu0 0.0
        %1086 = vmatpush1.msra.mxu0 %v1074
        %1087 = vmatprep.subr.mxu0 0.0
        %1088 = vmatpush1.msra.mxu0 %v1075
        %1089 = vmatprep.subr.mxu0 0.0
        %1090 = vmatpush1.msra.mxu0 %v1076
        %1091 = vmatprep.subr.mxu0 0.0
        %1092 = vmatpush1.msra.mxu0 0.0
        %1093 = vmatprep.subr.mxu0 0.0
        %1094 = vmatpush1.msra.mxu0 0.0
        %1095 = vmatprep.subr.mxu0 0.0
        %1096 = vmatpush1.msra.mxu0 0.0
        %1097 = vmatprep.subr.mxu0 0.0
        %1098 = vmatpush1.msra.mxu0 0.0
        %1099 = vmatprep.subr.mxu0 0.0
        %1100 = vmatpush1.msra.mxu0 0.0
        %1101 = vmatprep.subr.mxu0 0.0
        %1102 = vmatpush1.msra.mxu0 0.0
        %1103 = vmatprep.subr.mxu0 0.0
        %1104 = vmatpush1.msra.mxu0 0.0
        %1105 = vmatprep.subr.mxu0 0.0
        %1106 = vmatpush1.msra.mxu0 0.0
        %1107 = vmatprep.subr.mxu0 0.0
        %1108 = vmatpush1.msra.mxu0 0.0
        %1109 = vmatprep.subr.mxu0 0.0
        %1110 = vmatpush1.msra.mxu0 0.0
        %1111 = vmatprep.subr.mxu0 0.0
        %1112 = vmatpush1.msra.mxu0 0.0
        %1113 = vmatprep.subr.mxu0 0.0
        %1114 = vmatpush1.msra.mxu0 0.0
        %1115 = vmatprep.subr.mxu0 0.0
        %1116 = vmatpush1.msra.mxu0 0.0
        %1117 = vmatprep.subr.mxu0 0.0
        %1118 = vmatpush1.msra.mxu0 0.0
        %1119 = vmatprep.subr.mxu0 0.0
        %1120 = vmatpush1.msra.mxu0 0.0
        %1121 = vmatprep.subr.mxu0 0.0
        %1122 = vmatpush1.msra.mxu0 0.0
        %1123 = vmatprep.subr.mxu0 0.0
        %1124 = vmatpush1.msra.mxu0 0.0
        %1125 = vmatprep.subr.mxu0 0.0
        %1126 = vmatpush1.msra.mxu0 0.0
        %1127 = vmatprep.subr.mxu0 0.0
        %1128 = vmatpush1.msra.mxu0 0.0
        %1129 = vmatprep.subr.mxu0 0.0
        %1130 = vmatpush1.msra.mxu0 0.0
        %1131 = vmatprep.subr.mxu0 0.0
        %1132 = vmatpush1.msra.mxu0 0.0
        %1133 = vmatprep.subr.mxu0 0.0
        %1134 = vmatpush1.msra.mxu0 0.0
        %1135 = vmatprep.subr.mxu0 0.0
        %1136 = vmatpush1.msra.mxu0 0.0
        %1137 = vmatprep.subr.mxu0 0.0
        %1138 = vmatpush1.msra.mxu0 0.0
        %1139 = vmatprep.subr.mxu0 0.0
        %1140 = vmatpush1.msra.mxu0 0.0
        %1141 = vmatprep.subr.mxu0 0.0
        %1142 = vmatpush1.msra.mxu0 0.0
        %1143 = vmatprep.subr.mxu0 0.0
        %1144 = vmatpush1.msra.mxu0 0.0
        %1145 = vmatprep.subr.mxu0 0.0
        %1146 = vmatpush1.msra.mxu0 0.0
        %1147 = vmatprep.mubr.f32.mxu0 0.0
        %1148 = vmatmul.mubr.f32.gmra.mrb[0].mxu0 %v1081
        %v1149 = vpop.f32.mrb[0].mxu0
        %v1150 = vadd.f32 %v1078, %v1149
        %v1151 = vpop.f32.mrb[0].mxu0
        %1152 = vdwg.mxu0
        %1153 = vst.msk [vmem:[%s498] sm:$0xff] %vm585, %v1150
        %s1154 = sand.u32 %s250, 1
        %s1155 = scalar_lea.sflag [#allocation4], %s1154
        %s1156 = sand.u32 %s250, 1
        %s1157 = smul.addr %s1156, 8
        %s1158 = scalar_lea.vmem [#allocation14], %s1157
        // Predicated region
        $region85: #{tpu_custom_call.1} parent=55 // pred_check
          %p1159 = pneg %p260
        $region86: #{tpu_custom_call.1} parent=55 // pred_check_branch
          %1161 = sbr.rel (%p1159) target = $region88
        $region87: #{tpu_custom_call.1} parent=55 // pred_region
          %s1163 = ssub.s32 128, 128
          %1164 = vsyncadd %s1155, %s1163
          %s1165 = smul.addr %s33, 128
          %s1166 = scalar_lea.hbm %s9, %s1165
          %s1168 = sshll.u32 %s1158, 4
          %s1169 = int_to_ptr.vmem [resolvable:$true] %s1168
          %1171 = dma.vmem_to_hbm [thread:$0]  %s1169, 128, %s1166, %s1155
        $region88: #{tpu_custom_call.1} parent=55 // pred_fallthru
          _
      $region56: #{tpu_custom_call.1} parent=5 // pred_fallthru
        _
      %p1172 = scmp.le.s32.totalorder 2, %s28
      // Predicated region
      $region89: #{tpu_custom_call.1} parent=5 // pred_check
        %p1173 = pneg %p1172
      $region90: #{tpu_custom_call.1} parent=5 // pred_check_branch
        %1175 = sbr.rel (%p1173) target = $region92
      $region91: #{tpu_custom_call.1} parent=5 // pred_region
        %s1176 = ssub.s32 %s28, 2
        // Predicated region
        $region93: #{tpu_custom_call.1} parent=91 // pred_check
          %p1177 = pneg %p266
        $region94: #{tpu_custom_call.1} parent=91 // pred_check_branch
          %1179 = sbr.rel (%p1177) target = $region96
        $region95: #{tpu_custom_call.1} parent=91 // pred_region
          %s1180 = sand.u32 %s251, 1
          %s1181 = scalar_lea.sflag [#allocation4], %s1180
          %s1182 = sand.u32 %s251, 1
          %s1183 = smul.addr %s1182, 8
          %s1184 = scalar_lea.vmem [#allocation14], %s1183
          %1185 = dma.done %s1181, 128
        $region96: #{tpu_custom_call.1} parent=91 // pred_fallthru
          _
      $region92: #{tpu_custom_call.1} parent=5 // pred_fallthru
        _
    $region6: #{tpu_custom_call.1} parent=1 // loop_footer
      %s32 = sadd.s32 1, %s28
    $region7: #{tpu_custom_call.1} parent=1 // loop_footer_branch
      %27 = sbr.rel target = $region3
    $region8: #{tpu_custom_call.1} parent=1 // loop_exit
      _
    %1186 = vsyncpa [#allocation3], 1
    %s1187 = scalar_lea.sflag [#allocation3], 1
    %1188 = vsyncpa %s1187, 1
    %1189 = vsyncpa [#allocation6], 1
    %s1190 = scalar_lea.sflag [#allocation6], 1
    %1191 = vsyncpa %s1190, 1
    %1192 = vsyncpa [#allocation9], 1
    %s1193 = scalar_lea.sflag [#allocation9], 1
    %1194 = vsyncpa %s1193, 1
    %1195 = vsyncpa [#allocation12], 1
    %1196 = vsyncpa [#allocation4], 1
    %s1197 = scalar_lea.sflag [#allocation4], 1
    %1198 = vsyncpa %s1197, 1

</llo_original>
